<compile_context>
chip_gen: v7x
topology: tpu7x:2x2x1
jax: 0.10.0
libtpu: 0.0.40
codegen_flags: <defaults>
</compile_context>

<pallas_src>
import functools

import jax
import jax.numpy as jnp
from jax import lax
from jax.experimental import pallas as pl
from jax.experimental.pallas import tpu as pltpu


def _bottleneck_kernel(shifts, per_tap, x_ref, mask_ref, w1_ref, b1_ref,
                       w2_ref, b2_ref, w3_ref, b3_ref, out_ref):
    """One grid step = b_tile images, each laid out as (C, Lp):
    channels on sublanes, flattened (zero-padded) spatial on lanes.

    x_ref  : (B, Cin, Lp)        input block (also the identity residual)
    mask_ref: (9, Lp)            per-tap boundary/tail masks (0/1, compute dtype)
    w1_ref : (Cmid, Cin)         1x1 conv1 weight (bn1 scale folded in)
    w2_ref : (Cmid, 9*Cmid)      3x3 conv2 weight, taps flattened (bn2 folded)
    w3_ref : (Cout, Cmid)        1x1 conv3 weight (bn3 scale folded in)
    b*_ref : (C, 1) f32          folded BatchNorm biases
    out_ref: (B, Cout, Lp)
    """
    B = x_ref.shape[0]
    Lp = x_ref.shape[2]
    Cmid = w1_ref.shape[0]
    cdt = w1_ref.dtype                                  # compute dtype

    w1 = w1_ref[...]
    w3 = w3_ref[...]
    b1 = b1_ref[...]
    b2 = b2_ref[...]
    b3 = b3_ref[...]
    masks = mask_ref[...]                               # (9, Lp)
    mrows = [masks[k:k + 1, :] for k in range(9)]       # hoisted (1, Lp) rows

    if per_tap:
        w2_parts = [w2_ref[:, k * Cmid:(k + 1) * Cmid] for k in range(9)]
    else:
        w2 = w2_ref[...]

    for b in range(B):                                  # small static unroll
        x = x_ref[b]                                    # (Cin, Lp)

        # ---- conv1 (1x1) + bn1 + relu; cast to compute dtype BEFORE rolls ----
        y1 = jnp.dot(w1, x, preferred_element_type=jnp.float32)
        y1 = jnp.maximum(y1 + b1, 0.0).astype(cdt)      # (Cmid, Lp)

        # ---- conv2 (3x3, pad=1): spatial shift == lane roll (XLU) + mask ----
        if per_tap:
            # Accumulating matmuls: consume each rolled tap immediately.
            y2 = None
            for k, shift in enumerate(shifts):
                t = y1 if shift == 0 else pltpu.roll(y1, (-shift) % Lp, axis=1)
                t = t * mrows[k]
                p = jnp.dot(w2_parts[k], t, preferred_element_type=jnp.float32)
                y2 = p if y2 is None else y2 + p
        else:
            # Small Cmid: fuse the 9 taps into one MXU matmul (K = 9*Cmid).
            taps = []
            for k, shift in enumerate(shifts):
                t = y1 if shift == 0 else pltpu.roll(y1, (-shift) % Lp, axis=1)
                taps.append(t * mrows[k])
            stacked = jnp.concatenate(taps, axis=0)     # (9*Cmid, Lp)
            y2 = jnp.dot(w2, stacked, preferred_element_type=jnp.float32)
        y2 = jnp.maximum(y2 + b2, 0.0).astype(cdt)      # (Cmid, Lp)

        # ---- conv3 (1x1) + bn3 + identity residual + relu ----
        y3 = jnp.dot(w3, y2, preferred_element_type=jnp.float32)
        y3 = y3 + b3 + x.astype(jnp.float32)
        out_ref[b] = jnp.maximum(y3, 0.0).astype(out_ref.dtype)


def _fold_bn(gamma, beta, mean, var, eps):
    scale = gamma / jnp.sqrt(var + eps)
    bias = beta - mean * scale
    return scale.astype(jnp.float32), bias.astype(jnp.float32)


def _pick_b_tile(n, bytes_per_image, target=1 << 20, cap=4 << 20):
    """Largest divisor of n whose per-step input stays under `cap`, preferring
    at least `target` bytes/step (amortizes ~0.35us/step pipeline overhead)."""
    best = 1
    for d in range(1, n + 1):
        if n % d:
            continue
        if d * bytes_per_image > cap:
            break
        best = d
        if d * bytes_per_image >= target:
            break
    return best


def bottleneck_forward(x_nchw, params, *, eps=1e-5,
                       compute_dtype=jnp.bfloat16, b_tile=None):
    """Pallas forward.  x_nchw: (N, C, H, W) like the PyTorch module.
    Returns (N, C, H, W) in `compute_dtype` (bf16 end-to-end by default)."""
    N, Cin, H, W = x_nchw.shape
    L = H * W
    Lp = ((L + 127) // 128) * 128                 # lane-pad to a multiple of 128
    Cmid = params["w1"].shape[0]                  # planes
    Cout = params["w3"].shape[0]                  # planes * expansion
    assert Cout == Cin, "identity residual requires inplanes == planes * 4"

    s1, b1 = _fold_bn(params["gamma1"], params["beta1"],
                      params["mean1"], params["var1"], eps)
    s2, b2 = _fold_bn(params["gamma2"], params["beta2"],
                      params["mean2"], params["var2"], eps)
    s3, b3 = _fold_bn(params["gamma3"], params["beta3"],
                      params["mean3"], params["var3"], eps)

    # Fold BN scales into conv weights; biases stay in f32 (added to f32 acc).
    w1m = (params["w1"].reshape(Cmid, Cin) * s1[:, None]).astype(compute_dtype)
    # (Cmid, Cmid, 3, 3) -> (Cmid, kh, kw, ci) -> (Cmid, 9*Cmid); column index
    # (kh*3 + kw)*Cmid + ci matches the in-kernel tap order / per-tap slices.
    w2m = (jnp.transpose(params["w2"], (0, 2, 3, 1)).reshape(Cmid, 9 * Cmid)
           * s2[:, None]).astype(compute_dtype)
    w3m = (params["w3"].reshape(Cout, Cmid) * s3[:, None]).astype(compute_dtype)
    b1m = b1.reshape(Cmid, 1)
    b2m = b2.reshape(Cmid, 1)
    b3m = b3.reshape(Cout, 1)

    # Precomputed per-tap boundary masks (+ padded-tail mask), shape (9, Lp).
    pos = jnp.arange(Lp, dtype=jnp.int32)
    row = pos // W
    col = pos % W
    valid = pos < L
    shifts = []
    mask_rows = []
    for dh in (-1, 0, 1):
        for dw in (-1, 0, 1):
            shifts.append(dh * W + dw)
            m = valid
            if dh > 0:
                m = m & (row < H - dh)
            elif dh < 0:
                m = m & (row >= -dh)
            if dw > 0:
                m = m & (col < W - dw)
            elif dw < 0:
                m = m & (col >= -dw)
            mask_rows.append(m)
    masks = jnp.stack(mask_rows, 0).astype(compute_dtype)        # (9, Lp)

    # Lane-dense, NCHW-native activation layout; zero-pad the spatial tail.
    x3 = x_nchw.reshape(N, Cin, L).astype(compute_dtype)
    if Lp != L:
        x3 = jnp.pad(x3, ((0, 0), (0, 0), (0, Lp - L)))

    bytes_per_image = Cin * Lp * jnp.dtype(compute_dtype).itemsize
    if b_tile is None:
        b_tile = _pick_b_tile(N, bytes_per_image)
    assert N % b_tile == 0
    grid = (N // b_tile,)

    per_tap = Cmid >= 128     # accumulating per-tap matmuls vs fused concat
    kernel = functools.partial(_bottleneck_kernel, tuple(shifts), per_tap)

    def run(weight_pipeline):
        kw = {} if weight_pipeline is None else {"pipeline_mode": weight_pipeline}

        def const_spec(shape):
            return pl.BlockSpec(shape, lambda n: (0, 0), **kw)

        return pl.pallas_call(
            kernel,
            out_shape=jax.ShapeDtypeStruct((N, Cout, Lp), compute_dtype),
            grid=grid,
            in_specs=[
                pl.BlockSpec((b_tile, Cin, Lp), lambda n: (n, 0, 0)),
                const_spec((9, Lp)),
                const_spec((Cmid, Cin)),
                const_spec((Cmid, 1)),
                const_spec((Cmid, 9 * Cmid)),
                const_spec((Cmid, 1)),
                const_spec((Cout, Cmid)),
                const_spec((Cout, 1)),
            ],
            out_specs=pl.BlockSpec((b_tile, Cout, Lp), lambda n: (n, 0, 0)),
            compiler_params=pltpu.CompilerParams(
                dimension_semantics=("parallel",),
                vmem_limit_bytes=64 * 1024 * 1024),
        )(x3, masks, w1m, b1m, w2m, b2m, w3m, b3m)

    try:
        # Single-buffer the resident (constant index_map) weights/biases/masks.
        out = run(pl.Buffered(1))
    except Exception:
        # Fallback for jax versions without pipeline_mode support.
        out = run(None)

    if Lp != L:
        out = out[:, :, :L]
    return out.reshape(N, Cout, H, W)


def reference_forward(x, params, eps=1e-5):
    """Pure-JAX NCHW reference of the eval-mode Bottleneck."""
    def bn(z, g, b, m, v):
        inv = g / jnp.sqrt(v + eps)
        return z * inv[None, :, None, None] + (b - m * inv)[None, :, None, None]

    dn = ("NCHW", "OIHW", "NCHW")
    hi = lax.Precision.HIGHEST
    out = lax.conv_general_dilated(x, params["w1"], (1, 1), "SAME",
                                   dimension_numbers=dn, precision=hi)
    out = jnp.maximum(bn(out, params["gamma1"], params["beta1"],
                         params["mean1"], params["var1"]), 0.0)
    out = lax.conv_general_dilated(out, params["w2"], (1, 1), "SAME",
                                   dimension_numbers=dn, precision=hi)
    out = jnp.maximum(bn(out, params["gamma2"], params["beta2"],
                         params["mean2"], params["var2"]), 0.0)
    out = lax.conv_general_dilated(out, params["w3"], (1, 1), "SAME",
                                   dimension_numbers=dn, precision=hi)
    out = bn(out, params["gamma3"], params["beta3"],
             params["mean3"], params["var3"])
    return jnp.maximum(out + x, 0.0)


def init_params(key, inplanes, planes):
    outp = planes * 4
    ks = jax.random.split(key, 15)
    return {
        "w1": 0.1 * jax.random.normal(ks[0], (planes, inplanes, 1, 1), jnp.float32),
        "w2": 0.1 * jax.random.normal(ks[1], (planes, planes, 3, 3), jnp.float32),
        "w3": 0.1 * jax.random.normal(ks[2], (outp, planes, 1, 1), jnp.float32),
        "gamma1": 1.0 + 0.1 * jax.random.normal(ks[3], (planes,), jnp.float32),
        "beta1": 0.1 * jax.random.normal(ks[4], (planes,), jnp.float32),
        "mean1": 0.1 * jax.random.normal(ks[5], (planes,), jnp.float32),
        "var1": 0.5 + jnp.abs(jax.random.normal(ks[6], (planes,), jnp.float32)),
        "gamma2": 1.0 + 0.1 * jax.random.normal(ks[7], (planes,), jnp.float32),
        "beta2": 0.1 * jax.random.normal(ks[8], (planes,), jnp.float32),
        "mean2": 0.1 * jax.random.normal(ks[9], (planes,), jnp.float32),
        "var2": 0.5 + jnp.abs(jax.random.normal(ks[10], (planes,), jnp.float32)),
        "gamma3": 1.0 + 0.1 * jax.random.normal(ks[11], (outp,), jnp.float32),
        "beta3": 0.1 * jax.random.normal(ks[12], (outp,), jnp.float32),
        "mean3": 0.1 * jax.random.normal(ks[13], (outp,), jnp.float32),
        "var3": 0.5 + jnp.abs(jax.random.normal(ks[14], (outp,), jnp.float32)),
    }


if __name__ == "__main__":
    key = jax.random.PRNGKey(0)
    k_x, k_p, k_x2, k_p2 = jax.random.split(key, 4)

    # ---- Config A: small block, L = 256 (no padding), fused-concat conv2 ----
    N, planes, H, W = 2, 8, 16, 16
    inplanes = planes * 4            # identity residual: inplanes == planes * 4
    x = jax.random.normal(k_x, (N, inplanes, H, W), jnp.float32)
    params = init_params(k_p, inplanes, planes)
    ref = jax.block_until_ready(reference_forward(x, params))

    # f32 compute path (one image per step): strict check.
    out_f32 = jax.block_until_ready(
        bottleneck_forward(x, params, compute_dtype=jnp.float32, b_tile=1))
    assert out_f32.shape == ref.shape
    err = float(jnp.max(jnp.abs(out_f32 - ref)))
    assert jnp.allclose(out_f32, ref, atol=1e-4, rtol=1e-4), err

    # Default path: bf16 end-to-end I/O + f32 accumulation, batched grid step.
    out_bf16 = jax.block_until_ready(bottleneck_forward(x, params))
    out_bf16_f32 = out_bf16.astype(jnp.float32)
    err_bf = float(jnp.max(jnp.abs(out_bf16_f32 - ref)))
    assert jnp.allclose(out_bf16_f32, ref, atol=2e-1, rtol=5e-2), err_bf

    # ---- Config B: Cmid=128 (per-tap accumulating matmuls), 14x14 spatial ----
    # (L=196 padded to 256 lanes), two images per grid step.
    N2, planes2, H2, W2 = 2, 128, 14, 14
    inplanes2 = planes2 * 4
    x2 = jax.random.normal(k_x2, (N2, inplanes2, H2, W2), jnp.float32)
    params2 = init_params(k_p2, inplanes2, planes2)
    ref2 = jax.block_until_ready(reference_forward(x2, params2))
    out2 = jax.block_until_ready(
        bottleneck_forward(x2, params2, compute_dtype=jnp.float32))
    err2 = float(jnp.max(jnp.abs(out2 - ref2)))
    assert jnp.allclose(out2, ref2, atol=1e-2, rtol=1e-3), err2

    print("KERNEL_OK")
</pallas_src>

<mosaic_0001>
module attributes {stable_mosaic.version = 11 : i64} {
  func.func @_bottleneck_kernel(%arg0: i32, %arg1: memref<1x32x256xf32, #tpu.memory_space<vmem>>, %arg2: memref<9x256xf32, #tpu.memory_space<vmem>>, %arg3: memref<8x32xf32, #tpu.memory_space<vmem>>, %arg4: memref<8x1xf32, #tpu.memory_space<vmem>>, %arg5: memref<8x72xf32, #tpu.memory_space<vmem>>, %arg6: memref<8x1xf32, #tpu.memory_space<vmem>>, %arg7: memref<32x8xf32, #tpu.memory_space<vmem>>, %arg8: memref<32x1xf32, #tpu.memory_space<vmem>>, %arg9: memref<1x32x256xf32, #tpu.memory_space<vmem>>) attributes {dimension_semantics = [#tpu.dimension_semantics<parallel>], iteration_bounds = array<i64: 2>, scalar_prefetch = 0 : i64, scratch_operands = 0 : i64, tpu.core_type = #tpu.core_type<tc>, window_params = [{transform_indices = @transform_0, window_bounds = array<i64: 1, 32, 256>}, {pipeline_mode = #tpu.pipeline_mode<synchronous>, transform_indices = @transform_1, window_bounds = array<i64: 9, 256>}, {pipeline_mode = #tpu.pipeline_mode<synchronous>, transform_indices = @transform_2, window_bounds = array<i64: 8, 32>}, {pipeline_mode = #tpu.pipeline_mode<synchronous>, transform_indices = @transform_3, window_bounds = array<i64: 8, 1>}, {pipeline_mode = #tpu.pipeline_mode<synchronous>, transform_indices = @transform_4, window_bounds = array<i64: 8, 72>}, {pipeline_mode = #tpu.pipeline_mode<synchronous>, transform_indices = @transform_5, window_bounds = array<i64: 8, 1>}, {pipeline_mode = #tpu.pipeline_mode<synchronous>, transform_indices = @transform_6, window_bounds = array<i64: 32, 8>}, {pipeline_mode = #tpu.pipeline_mode<synchronous>, transform_indices = @transform_7, window_bounds = array<i64: 32, 1>}, {transform_indices = @transform_8, window_bounds = array<i64: 1, 32, 256>}]} {
    %c0 = arith.constant 0 : index
    %c0_0 = arith.constant 0 : index
    %0 = vector.load %arg3[%c0, %c0_0] : memref<8x32xf32, #tpu.memory_space<vmem>>, vector<8x32xf32>
    %c0_1 = arith.constant 0 : index
    %c0_2 = arith.constant 0 : index
    %1 = vector.load %arg7[%c0_1, %c0_2] : memref<32x8xf32, #tpu.memory_space<vmem>>, vector<32x8xf32>
    %c0_3 = arith.constant 0 : index
    %c0_4 = arith.constant 0 : index
    %2 = vector.load %arg4[%c0_3, %c0_4] : memref<8x1xf32, #tpu.memory_space<vmem>>, vector<8x1xf32>
    %c0_5 = arith.constant 0 : index
    %c0_6 = arith.constant 0 : index
    %3 = vector.load %arg6[%c0_5, %c0_6] : memref<8x1xf32, #tpu.memory_space<vmem>>, vector<8x1xf32>
    %c0_7 = arith.constant 0 : index
    %c0_8 = arith.constant 0 : index
    %4 = vector.load %arg8[%c0_7, %c0_8] : memref<32x1xf32, #tpu.memory_space<vmem>>, vector<32x1xf32>
    %c0_9 = arith.constant 0 : index
    %c0_10 = arith.constant 0 : index
    %5 = vector.load %arg2[%c0_9, %c0_10] : memref<9x256xf32, #tpu.memory_space<vmem>>, vector<9x256xf32>
    %6 = vector.extract_strided_slice %5 {offsets = [0, 0], sizes = [1, 256], strides = [1, 1]} : vector<9x256xf32> to vector<1x256xf32>
    %7 = vector.extract_strided_slice %5 {offsets = [1, 0], sizes = [1, 256], strides = [1, 1]} : vector<9x256xf32> to vector<1x256xf32>
    %8 = vector.extract_strided_slice %5 {offsets = [2, 0], sizes = [1, 256], strides = [1, 1]} : vector<9x256xf32> to vector<1x256xf32>
    %9 = vector.extract_strided_slice %5 {offsets = [3, 0], sizes = [1, 256], strides = [1, 1]} : vector<9x256xf32> to vector<1x256xf32>
    %10 = vector.extract_strided_slice %5 {offsets = [4, 0], sizes = [1, 256], strides = [1, 1]} : vector<9x256xf32> to vector<1x256xf32>
    %11 = vector.extract_strided_slice %5 {offsets = [5, 0], sizes = [1, 256], strides = [1, 1]} : vector<9x256xf32> to vector<1x256xf32>
    %12 = vector.extract_strided_slice %5 {offsets = [6, 0], sizes = [1, 256], strides = [1, 1]} : vector<9x256xf32> to vector<1x256xf32>
    %13 = vector.extract_strided_slice %5 {offsets = [7, 0], sizes = [1, 256], strides = [1, 1]} : vector<9x256xf32> to vector<1x256xf32>
    %14 = vector.extract_strided_slice %5 {offsets = [8, 0], sizes = [1, 256], strides = [1, 1]} : vector<9x256xf32> to vector<1x256xf32>
    %c0_11 = arith.constant 0 : index
    %c0_12 = arith.constant 0 : index
    %15 = vector.load %arg5[%c0_11, %c0_12] : memref<8x72xf32, #tpu.memory_space<vmem>>, vector<8x72xf32>
    %c0_13 = arith.constant 0 : index
    %c0_14 = arith.constant 0 : index
    %c0_15 = arith.constant 0 : index
    %16 = vector.load %arg1[%c0_13, %c0_14, %c0_15] : memref<1x32x256xf32, #tpu.memory_space<vmem>>, vector<1x32x256xf32>
    %17 = vector.shape_cast %16 : vector<1x32x256xf32> to vector<32x256xf32>
    %cst = arith.constant dense<0.000000e+00> : vector<8x256xf32>
    %18 = tpu.matmul %0, %17, %cst {dimension_numbers = #tpu.dot_dimension_numbers<[1], [0], [0], [1], [0, 0, 1, 1], [], []>} : vector<8x32xf32>, vector<32x256xf32>, vector<8x256xf32> -> vector<8x256xf32>
    %19 = vector.broadcast %2 : vector<8x1xf32> to vector<8x256xf32>
    %20 = arith.addf %18, %19 : vector<8x256xf32>
    %cst_16 = arith.constant 0.000000e+00 : f32
    %21 = vector.broadcast %cst_16 : f32 to vector<8x256xf32>
    %22 = arith.maximumf %20, %21 : vector<8x256xf32>
    %c17_i32 = arith.constant 17 : i32
    %23 = tpu.dynamic_rotate %22 by %c17_i32 dim 1 : vector<8x256xf32>, i32 -> vector<8x256xf32>
    %24 = vector.broadcast %6 : vector<1x256xf32> to vector<8x256xf32>
    %25 = arith.mulf %23, %24 : vector<8x256xf32>
    %c16_i32 = arith.constant 16 : i32
    %26 = tpu.dynamic_rotate %22 by %c16_i32 dim 1 : vector<8x256xf32>, i32 -> vector<8x256xf32>
    %27 = vector.broadcast %7 : vector<1x256xf32> to vector<8x256xf32>
    %28 = arith.mulf %26, %27 : vector<8x256xf32>
    %c15_i32 = arith.constant 15 : i32
    %29 = tpu.dynamic_rotate %22 by %c15_i32 dim 1 : vector<8x256xf32>, i32 -> vector<8x256xf32>
    %30 = vector.broadcast %8 : vector<1x256xf32> to vector<8x256xf32>
    %31 = arith.mulf %29, %30 : vector<8x256xf32>
    %c1_i32 = arith.constant 1 : i32
    %32 = tpu.dynamic_rotate %22 by %c1_i32 dim 1 : vector<8x256xf32>, i32 -> vector<8x256xf32>
    %33 = vector.broadcast %9 : vector<1x256xf32> to vector<8x256xf32>
    %34 = arith.mulf %32, %33 : vector<8x256xf32>
    %35 = vector.broadcast %10 : vector<1x256xf32> to vector<8x256xf32>
    %36 = arith.mulf %22, %35 : vector<8x256xf32>
    %c255_i32 = arith.constant 255 : i32
    %37 = tpu.dynamic_rotate %22 by %c255_i32 dim 1 : vector<8x256xf32>, i32 -> vector<8x256xf32>
    %38 = vector.broadcast %11 : vector<1x256xf32> to vector<8x256xf32>
    %39 = arith.mulf %37, %38 : vector<8x256xf32>
    %c241_i32 = arith.constant 241 : i32
    %40 = tpu.dynamic_rotate %22 by %c241_i32 dim 1 : vector<8x256xf32>, i32 -> vector<8x256xf32>
    %41 = vector.broadcast %12 : vector<1x256xf32> to vector<8x256xf32>
    %42 = arith.mulf %40, %41 : vector<8x256xf32>
    %c240_i32 = arith.constant 240 : i32
    %43 = tpu.dynamic_rotate %22 by %c240_i32 dim 1 : vector<8x256xf32>, i32 -> vector<8x256xf32>
    %44 = vector.broadcast %13 : vector<1x256xf32> to vector<8x256xf32>
    %45 = arith.mulf %43, %44 : vector<8x256xf32>
    %c239_i32 = arith.constant 239 : i32
    %46 = tpu.dynamic_rotate %22 by %c239_i32 dim 1 : vector<8x256xf32>, i32 -> vector<8x256xf32>
    %47 = vector.broadcast %14 : vector<1x256xf32> to vector<8x256xf32>
    %48 = arith.mulf %46, %47 : vector<8x256xf32>
    %49 = tpu.concatenate %25, %28, %31, %34, %36, %39, %42, %45, %48 in 0 : vector<8x256xf32>, vector<8x256xf32>, vector<8x256xf32>, vector<8x256xf32>, vector<8x256xf32>, vector<8x256xf32>, vector<8x256xf32>, vector<8x256xf32>, vector<8x256xf32> -> vector<72x256xf32>
    %cst_17 = arith.constant dense<0.000000e+00> : vector<8x256xf32>
    %50 = tpu.matmul %15, %49, %cst_17 {dimension_numbers = #tpu.dot_dimension_numbers<[1], [0], [0], [1], [0, 0, 1, 1], [], []>} : vector<8x72xf32>, vector<72x256xf32>, vector<8x256xf32> -> vector<8x256xf32>
    %51 = vector.broadcast %3 : vector<8x1xf32> to vector<8x256xf32>
    %52 = arith.addf %50, %51 : vector<8x256xf32>
    %cst_18 = arith.constant 0.000000e+00 : f32
    %53 = vector.broadcast %cst_18 : f32 to vector<8x256xf32>
    %54 = arith.maximumf %52, %53 : vector<8x256xf32>
    %cst_19 = arith.constant dense<0.000000e+00> : vector<32x256xf32>
    %55 = tpu.matmul %1, %54, %cst_19 {dimension_numbers = #tpu.dot_dimension_numbers<[1], [0], [0], [1], [0, 0, 1, 1], [], []>} : vector<32x8xf32>, vector<8x256xf32>, vector<32x256xf32> -> vector<32x256xf32>
    %56 = vector.broadcast %4 : vector<32x1xf32> to vector<32x256xf32>
    %57 = arith.addf %55, %56 : vector<32x256xf32>
    %58 = arith.addf %57, %17 : vector<32x256xf32>
    %cst_20 = arith.constant 0.000000e+00 : f32
    %59 = vector.broadcast %cst_20 : f32 to vector<32x256xf32>
    %60 = arith.maximumf %58, %59 : vector<32x256xf32>
    %c0_21 = arith.constant 0 : index
    %c0_22 = arith.constant 0 : index
    %c0_23 = arith.constant 0 : index
    %61 = vector.load %arg9[%c0_21, %c0_22, %c0_23] : memref<1x32x256xf32, #tpu.memory_space<vmem>>, vector<1x32x256xf32>
    %62 = vector.shape_cast %61 : vector<1x32x256xf32> to vector<32x256xf32>
    %63 = vector.shape_cast %60 : vector<32x256xf32> to vector<1x32x256xf32>
    tpu.vector_store %arg9[%c0_21, %c0_22, %c0_23], %63 {strides = array<i32>} : memref<1x32x256xf32, #tpu.memory_space<vmem>>, vector<1x32x256xf32>,
    return
  }
  func.func @transform_0(%arg0: i32) -> (i32, i32, i32) {
    %c0_i32 = arith.constant 0 : i32
    %c0_i32_0 = arith.constant 0 : i32
    %c0_i32_1 = arith.constant 0 : i32
    return %arg0, %c0_i32, %c0_i32_0 : i32, i32, i32
  }
  func.func @transform_1(%arg0: i32) -> (i32, i32) {
    %c0_i32 = arith.constant 0 : i32
    %c0_i32_0 = arith.constant 0 : i32
    %c0_i32_1 = arith.constant 0 : i32
    return %c0_i32, %c0_i32_0 : i32, i32
  }
  func.func @transform_2(%arg0: i32) -> (i32, i32) {
    %c0_i32 = arith.constant 0 : i32
    %c0_i32_0 = arith.constant 0 : i32
    %c0_i32_1 = arith.constant 0 : i32
    return %c0_i32, %c0_i32_0 : i32, i32
  }
  func.func @transform_3(%arg0: i32) -> (i32, i32) {
    %c0_i32 = arith.constant 0 : i32
    %c0_i32_0 = arith.constant 0 : i32
    %c0_i32_1 = arith.constant 0 : i32
    return %c0_i32, %c0_i32_0 : i32, i32
  }
  func.func @transform_4(%arg0: i32) -> (i32, i32) {
    %c0_i32 = arith.constant 0 : i32
    %c0_i32_0 = arith.constant 0 : i32
    %c0_i32_1 = arith.constant 0 : i32
    return %c0_i32, %c0_i32_0 : i32, i32
  }
  func.func @transform_5(%arg0: i32) -> (i32, i32) {
    %c0_i32 = arith.constant 0 : i32
    %c0_i32_0 = arith.constant 0 : i32
    %c0_i32_1 = arith.constant 0 : i32
    return %c0_i32, %c0_i32_0 : i32, i32
  }
  func.func @transform_6(%arg0: i32) -> (i32, i32) {
    %c0_i32 = arith.constant 0 : i32
    %c0_i32_0 = arith.constant 0 : i32
    %c0_i32_1 = arith.constant 0 : i32
    return %c0_i32, %c0_i32_0 : i32, i32
  }
  func.func @transform_7(%arg0: i32) -> (i32, i32) {
    %c0_i32 = arith.constant 0 : i32
    %c0_i32_0 = arith.constant 0 : i32
    %c0_i32_1 = arith.constant 0 : i32
    return %c0_i32, %c0_i32_0 : i32, i32
  }
  func.func @transform_8(%arg0: i32) -> (i32, i32, i32) {
    %c0_i32 = arith.constant 0 : i32
    %c0_i32_0 = arith.constant 0 : i32
    %c0_i32_1 = arith.constant 0 : i32
    return %arg0, %c0_i32, %c0_i32_0 : i32, i32, i32
  }
}

module attributes {stable_mosaic.version = 11 : i64} {
  func.func @_bottleneck_kernel(%arg0: i32, %arg1: memref<1x32x256xf32, #tpu.memory_space<vmem>>, %arg2: memref<9x256xf32, #tpu.memory_space<vmem>>, %arg3: memref<8x32xf32, #tpu.memory_space<vmem>>, %arg4: memref<8x1xf32, #tpu.memory_space<vmem>>, %arg5: memref<8x72xf32, #tpu.memory_space<vmem>>, %arg6: memref<8x1xf32, #tpu.memory_space<vmem>>, %arg7: memref<32x8xf32, #tpu.memory_space<vmem>>, %arg8: memref<32x1xf32, #tpu.memory_space<vmem>>, %arg9: memref<1x32x256xf32, #tpu.memory_space<vmem>>) attributes {dimension_semantics = [#tpu.dimension_semantics<parallel>], iteration_bounds = array<i64: 2>, scalar_prefetch = 0 : i64, scratch_operands = 0 : i64, tpu.core_type = #tpu.core_type<tc>, window_params = [{transform_indices = @transform_0, window_bounds = array<i64: 1, 32, 256>}, {pipeline_mode = #tpu.pipeline_mode<synchronous>, transform_indices = @transform_1, window_bounds = array<i64: 9, 256>}, {pipeline_mode = #tpu.pipeline_mode<synchronous>, transform_indices = @transform_2, window_bounds = array<i64: 8, 32>}, {pipeline_mode = #tpu.pipeline_mode<synchronous>, transform_indices = @transform_3, window_bounds = array<i64: 8, 1>}, {pipeline_mode = #tpu.pipeline_mode<synchronous>, transform_indices = @transform_4, window_bounds = array<i64: 8, 72>}, {pipeline_mode = #tpu.pipeline_mode<synchronous>, transform_indices = @transform_5, window_bounds = array<i64: 8, 1>}, {pipeline_mode = #tpu.pipeline_mode<synchronous>, transform_indices = @transform_6, window_bounds = array<i64: 32, 8>}, {pipeline_mode = #tpu.pipeline_mode<synchronous>, transform_indices = @transform_7, window_bounds = array<i64: 32, 1>}, {transform_indices = @transform_8, window_bounds = array<i64: 1, 32, 256>}]} {
    %c0 = arith.constant 0 : index
    %c0_0 = arith.constant 0 : index
    %0 = vector.load %arg3[%c0, %c0_0] : memref<8x32xf32, #tpu.memory_space<vmem>>, vector<8x32xf32>
    %c0_1 = arith.constant 0 : index
    %c0_2 = arith.constant 0 : index
    %1 = vector.load %arg7[%c0_1, %c0_2] : memref<32x8xf32, #tpu.memory_space<vmem>>, vector<32x8xf32>
    %c0_3 = arith.constant 0 : index
    %c0_4 = arith.constant 0 : index
    %2 = vector.load %arg4[%c0_3, %c0_4] : memref<8x1xf32, #tpu.memory_space<vmem>>, vector<8x1xf32>
    %c0_5 = arith.constant 0 : index
    %c0_6 = arith.constant 0 : index
    %3 = vector.load %arg6[%c0_5, %c0_6] : memref<8x1xf32, #tpu.memory_space<vmem>>, vector<8x1xf32>
    %c0_7 = arith.constant 0 : index
    %c0_8 = arith.constant 0 : index
    %4 = vector.load %arg8[%c0_7, %c0_8] : memref<32x1xf32, #tpu.memory_space<vmem>>, vector<32x1xf32>
    %c0_9 = arith.constant 0 : index
    %c0_10 = arith.constant 0 : index
    %5 = vector.load %arg2[%c0_9, %c0_10] : memref<9x256xf32, #tpu.memory_space<vmem>>, vector<9x256xf32>
    %6 = vector.extract_strided_slice %5 {offsets = [0, 0], sizes = [1, 256], strides = [1, 1]} : vector<9x256xf32> to vector<1x256xf32>
    %7 = vector.extract_strided_slice %5 {offsets = [1, 0], sizes = [1, 256], strides = [1, 1]} : vector<9x256xf32> to vector<1x256xf32>
    %8 = vector.extract_strided_slice %5 {offsets = [2, 0], sizes = [1, 256], strides = [1, 1]} : vector<9x256xf32> to vector<1x256xf32>
    %9 = vector.extract_strided_slice %5 {offsets = [3, 0], sizes = [1, 256], strides = [1, 1]} : vector<9x256xf32> to vector<1x256xf32>
    %10 = vector.extract_strided_slice %5 {offsets = [4, 0], sizes = [1, 256], strides = [1, 1]} : vector<9x256xf32> to vector<1x256xf32>
    %11 = vector.extract_strided_slice %5 {offsets = [5, 0], sizes = [1, 256], strides = [1, 1]} : vector<9x256xf32> to vector<1x256xf32>
    %12 = vector.extract_strided_slice %5 {offsets = [6, 0], sizes = [1, 256], strides = [1, 1]} : vector<9x256xf32> to vector<1x256xf32>
    %13 = vector.extract_strided_slice %5 {offsets = [7, 0], sizes = [1, 256], strides = [1, 1]} : vector<9x256xf32> to vector<1x256xf32>
    %14 = vector.extract_strided_slice %5 {offsets = [8, 0], sizes = [1, 256], strides = [1, 1]} : vector<9x256xf32> to vector<1x256xf32>
    %c0_11 = arith.constant 0 : index
    %c0_12 = arith.constant 0 : index
    %15 = vector.load %arg5[%c0_11, %c0_12] : memref<8x72xf32, #tpu.memory_space<vmem>>, vector<8x72xf32>
    %c0_13 = arith.constant 0 : index
    %c0_14 = arith.constant 0 : index
    %c0_15 = arith.constant 0 : index
    %16 = vector.load %arg1[%c0_13, %c0_14, %c0_15] : memref<1x32x256xf32, #tpu.memory_space<vmem>>, vector<1x32x256xf32>
    %17 = vector.shape_cast %16 : vector<1x32x256xf32> to vector<32x256xf32>
    %cst = arith.constant dense<0.000000e+00> : vector<8x256xf32>
    %18 = tpu.matmul %0, %17, %cst {dimension_numbers = #tpu.dot_dimension_numbers<[1], [0], [0], [1], [0, 0, 1, 1], [], []>} : vector<8x32xf32>, vector<32x256xf32>, vector<8x256xf32> -> vector<8x256xf32>
    %19 = vector.broadcast %2 : vector<8x1xf32> to vector<8x256xf32>
    %20 = arith.addf %18, %19 : vector<8x256xf32>
    %cst_16 = arith.constant 0.000000e+00 : f32
    %21 = vector.broadcast %cst_16 : f32 to vector<8x256xf32>
    %22 = arith.maximumf %20, %21 : vector<8x256xf32>
    %c17_i32 = arith.constant 17 : i32
    %23 = tpu.dynamic_rotate %22 by %c17_i32 dim 1 : vector<8x256xf32>, i32 -> vector<8x256xf32>
    %24 = vector.broadcast %6 : vector<1x256xf32> to vector<8x256xf32>
    %25 = arith.mulf %23, %24 : vector<8x256xf32>
    %c16_i32 = arith.constant 16 : i32
    %26 = tpu.dynamic_rotate %22 by %c16_i32 dim 1 : vector<8x256xf32>, i32 -> vector<8x256xf32>
    %27 = vector.broadcast %7 : vector<1x256xf32> to vector<8x256xf32>
    %28 = arith.mulf %26, %27 : vector<8x256xf32>
    %c15_i32 = arith.constant 15 : i32
    %29 = tpu.dynamic_rotate %22 by %c15_i32 dim 1 : vector<8x256xf32>, i32 -> vector<8x256xf32>
    %30 = vector.broadcast %8 : vector<1x256xf32> to vector<8x256xf32>
    %31 = arith.mulf %29, %30 : vector<8x256xf32>
    %c1_i32 = arith.constant 1 : i32
    %32 = tpu.dynamic_rotate %22 by %c1_i32 dim 1 : vector<8x256xf32>, i32 -> vector<8x256xf32>
    %33 = vector.broadcast %9 : vector<1x256xf32> to vector<8x256xf32>
    %34 = arith.mulf %32, %33 : vector<8x256xf32>
    %35 = vector.broadcast %10 : vector<1x256xf32> to vector<8x256xf32>
    %36 = arith.mulf %22, %35 : vector<8x256xf32>
    %c255_i32 = arith.constant 255 : i32
    %37 = tpu.dynamic_rotate %22 by %c255_i32 dim 1 : vector<8x256xf32>, i32 -> vector<8x256xf32>
    %38 = vector.broadcast %11 : vector<1x256xf32> to vector<8x256xf32>
    %39 = arith.mulf %37, %38 : vector<8x256xf32>
    %c241_i32 = arith.constant 241 : i32
    %40 = tpu.dynamic_rotate %22 by %c241_i32 dim 1 : vector<8x256xf32>, i32 -> vector<8x256xf32>
    %41 = vector.broadcast %12 : vector<1x256xf32> to vector<8x256xf32>
    %42 = arith.mulf %40, %41 : vector<8x256xf32>
    %c240_i32 = arith.constant 240 : i32
    %43 = tpu.dynamic_rotate %22 by %c240_i32 dim 1 : vector<8x256xf32>, i32 -> vector<8x256xf32>
    %44 = vector.broadcast %13 : vector<1x256xf32> to vector<8x256xf32>
    %45 = arith.mulf %43, %44 : vector<8x256xf32>
    %c239_i32 = arith.constant 239 : i32
    %46 = tpu.dynamic_rotate %22 by %c239_i32 dim 1 : vector<8x256xf32>, i32 -> vector<8x256xf32>
    %47 = vector.broadcast %14 : vector<1x256xf32> to vector<8x256xf32>
    %48 = arith.mulf %46, %47 : vector<8x256xf32>
    %49 = tpu.concatenate %25, %28, %31, %34, %36, %39, %42, %45, %48 in 0 : vector<8x256xf32>, vector<8x256xf32>, vector<8x256xf32>, vector<8x256xf32>, vector<8x256xf32>, vector<8x256xf32>, vector<8x256xf32>, vector<8x256xf32>, vector<8x256xf32> -> vector<72x256xf32>
    %cst_17 = arith.constant dense<0.000000e+00> : vector<8x256xf32>
    %50 = tpu.matmul %15, %49, %cst_17 {dimension_numbers = #tpu.dot_dimension_numbers<[1], [0], [0], [1], [0, 0, 1, 1], [], []>} : vector<8x72xf32>, vector<72x256xf32>, vector<8x256xf32> -> vector<8x256xf32>
    %51 = vector.broadcast %3 : vector<8x1xf32> to vector<8x256xf32>
    %52 = arith.addf %50, %51 : vector<8x256xf32>
    %cst_18 = arith.constant 0.000000e+00 : f32
    %53 = vector.broadcast %cst_18 : f32 to vector<8x256xf32>
    %54 = arith.maximumf %52, %53 : vector<8x256xf32>
    %cst_19 = arith.constant dense<0.000000e+00> : vector<32x256xf32>
    %55 = tpu.matmul %1, %54, %cst_19 {dimension_numbers = #tpu.dot_dimension_numbers<[1], [0], [0], [1], [0, 0, 1, 1], [], []>} : vector<32x8xf32>, vector<8x256xf32>, vector<32x256xf32> -> vector<32x256xf32>
    %56 = vector.broadcast %4 : vector<32x1xf32> to vector<32x256xf32>
    %57 = arith.addf %55, %56 : vector<32x256xf32>
    %58 = arith.addf %57, %17 : vector<32x256xf32>
    %cst_20 = arith.constant 0.000000e+00 : f32
    %59 = vector.broadcast %cst_20 : f32 to vector<32x256xf32>
    %60 = arith.maximumf %58, %59 : vector<32x256xf32>
    %c0_21 = arith.constant 0 : index
    %c0_22 = arith.constant 0 : index
    %c0_23 = arith.constant 0 : index
    %61 = vector.load %arg9[%c0_21, %c0_22, %c0_23] : memref<1x32x256xf32, #tpu.memory_space<vmem>>, vector<1x32x256xf32>
    %62 = vector.shape_cast %61 : vector<1x32x256xf32> to vector<32x256xf32>
    %63 = vector.shape_cast %60 : vector<32x256xf32> to vector<1x32x256xf32>
    tpu.vector_store %arg9[%c0_21, %c0_22, %c0_23], %63 {strides = array<i32>} : memref<1x32x256xf32, #tpu.memory_space<vmem>>, vector<1x32x256xf32>,
    return
  }
  func.func @transform_0(%arg0: i32) -> (i32, i32, i32) {
    %c0_i32 = arith.constant 0 : i32
    %c0_i32_0 = arith.constant 0 : i32
    %c0_i32_1 = arith.constant 0 : i32
    return %arg0, %c0_i32, %c0_i32_0 : i32, i32, i32
  }
  func.func @transform_1(%arg0: i32) -> (i32, i32) {
    %c0_i32 = arith.constant 0 : i32
    %c0_i32_0 = arith.constant 0 : i32
    %c0_i32_1 = arith.constant 0 : i32
    return %c0_i32, %c0_i32_0 : i32, i32
  }
  func.func @transform_2(%arg0: i32) -> (i32, i32) {
    %c0_i32 = arith.constant 0 : i32
    %c0_i32_0 = arith.constant 0 : i32
    %c0_i32_1 = arith.constant 0 : i32
    return %c0_i32, %c0_i32_0 : i32, i32
  }
  func.func @transform_3(%arg0: i32) -> (i32, i32) {
    %c0_i32 = arith.constant 0 : i32
    %c0_i32_0 = arith.constant 0 : i32
    %c0_i32_1 = arith.constant 0 : i32
    return %c0_i32, %c0_i32_0 : i32, i32
  }
  func.func @transform_4(%arg0: i32) -> (i32, i32) {
    %c0_i32 = arith.constant 0 : i32
    %c0_i32_0 = arith.constant 0 : i32
    %c0_i32_1 = arith.constant 0 : i32
    return %c0_i32, %c0_i32_0 : i32, i32
  }
  func.func @transform_5(%arg0: i32) -> (i32, i32) {
    %c0_i32 = arith.constant 0 : i32
    %c0_i32_0 = arith.constant 0 : i32
    %c0_i32_1 = arith.constant 0 : i32
    return %c0_i32, %c0_i32_0 : i32, i32
  }
  func.func @transform_6(%arg0: i32) -> (i32, i32) {
    %c0_i32 = arith.constant 0 : i32
    %c0_i32_0 = arith.constant 0 : i32
    %c0_i32_1 = arith.constant 0 : i32
    return %c0_i32, %c0_i32_0 : i32, i32
  }
  func.func @transform_7(%arg0: i32) -> (i32, i32) {
    %c0_i32 = arith.constant 0 : i32
    %c0_i32_0 = arith.constant 0 : i32
    %c0_i32_1 = arith.constant 0 : i32
    return %c0_i32, %c0_i32_0 : i32, i32
  }
  func.func @transform_8(%arg0: i32) -> (i32, i32, i32) {
    %c0_i32 = arith.constant 0 : i32
    %c0_i32_0 = arith.constant 0 : i32
    %c0_i32_1 = arith.constant 0 : i32
    return %arg0, %c0_i32, %c0_i32_0 : i32, i32, i32
  }
}

</mosaic_0001>

<llo_original>
// kernel: tpu_custom_call.1
$region0: #{tpu_custom_call.1}
  #allocation0 [shape = 'u32[]', space=smem, size = 0x4, offset = 0x4, fixed_abs, tag = 'smem constant byte address 0x4 - core index']
  #allocation1 [shape = 'u32[144,128]{1,0:T(1,128)}', space=vmem, size = 0x12000, scoped, tag = 'internal scratch']
  %s0 = inlined_call_operand.hbm [shape: f32[2,32,256], index: 0, kind: input, shape index: {}]
  %s1 = inlined_call_operand.hbm [shape: f32[9,256], index: 1, kind: input, shape index: {}]
  %s2 = inlined_call_operand.hbm [shape: f32[8,32], index: 2, kind: input, shape index: {}]
  %s3 = inlined_call_operand.hbm [shape: f32[8,1], index: 3, kind: input, shape index: {}]
  %s4 = inlined_call_operand.hbm [shape: f32[8,72], index: 4, kind: input, shape index: {}]
  %s5 = inlined_call_operand.hbm [shape: f32[8,1], index: 5, kind: input, shape index: {}]
  %s6 = inlined_call_operand.hbm [shape: f32[32,8], index: 6, kind: input, shape index: {}]
  %s7 = inlined_call_operand.hbm [shape: f32[32,1], index: 7, kind: input, shape index: {}]
  %s8 = inlined_call_operand.hbm [shape: f32[2,32,256], index: 8, kind: output, shape index: {}]
  %s9 = sld [smem:[#allocation0]]
  $region97: #{tpu_custom_call.1} parent=0
    _
  %s11 = ssub.s32 1, %s9
  %s12 = scalar_select 0, %s11, %s9
  $region1: #{tpu_custom_call.1} parent=0
    #allocation2 [shape = 'u8[65536]{0}', space=vmem, size = 0x10000, scoped, tag = 'input window, operand 0']
    #allocation3 [shape = 's32[2]{0}', space=sflag, size = 0x8, scoped, tag = 'scoped memory for tpu_custom_call.1']
    #allocation4 [shape = 's32[2]{0}', space=sflag, size = 0x8, scoped, tag = 'scoped memory for tpu_custom_call.1']
    #allocation5 [shape = 'u8[16384]{0}', space=vmem, size = 0x4000, scoped, tag = 'input window, operand 1, single buffered']
    #allocation6 [shape = 's32[1]{0}', space=sflag, size = 0x4, scoped, tag = 'scoped memory for tpu_custom_call.1']
    #allocation7 [shape = 'u8[4096]{0}', space=vmem, size = 0x1000, scoped, tag = 'input window, operand 2, single buffered']
    #allocation8 [shape = 'u8[4096]{0}', space=vmem, size = 0x1000, scoped, tag = 'input window, operand 3, single buffered']
    #allocation9 [shape = 's32[1]{0}', space=sflag, size = 0x4, scoped, tag = 'scoped memory for tpu_custom_call.1']
    #allocation10 [shape = 'u8[4096]{0}', space=vmem, size = 0x1000, scoped, tag = 'input window, operand 4, single buffered']
    #allocation11 [shape = 'u8[4096]{0}', space=vmem, size = 0x1000, scoped, tag = 'input window, operand 5, single buffered']
    #allocation12 [shape = 's32[1]{0}', space=sflag, size = 0x4, scoped, tag = 'scoped memory for tpu_custom_call.1']
    #allocation13 [shape = 'u8[16384]{0}', space=vmem, size = 0x4000, scoped, tag = 'input window, operand 6, single buffered']
    #allocation14 [shape = 'u8[16384]{0}', space=vmem, size = 0x4000, scoped, tag = 'input window, operand 7, single buffered']
    #allocation15 [shape = 's32[1]{0}', space=sflag, size = 0x4, scoped, tag = 'scoped memory for tpu_custom_call.1']
    #allocation16 [shape = 'u8[65536]{0}', space=vmem, size = 0x10000, scoped, tag = 'output window, operand 0']
    %13 = vsyncpa [#allocation3], 0
    %s14 = scalar_lea.sflag [#allocation3], 1
    %15 = vsyncpa %s14, 0
    %16 = vsyncpa [#allocation6], 0
    %17 = vsyncpa [#allocation9], 0
    %18 = vsyncpa [#allocation12], 0
    %19 = vsyncpa [#allocation15], 0
    %20 = vsyncpa [#allocation4], 0
    %s21 = scalar_lea.sflag [#allocation4], 1
    %22 = vsyncpa %s21, 0
    loop: start=0, step=1, limit=4
    $region2: #{tpu_custom_call.1} parent=1 // loop_pre_header
      _
    $region3: #{tpu_custom_call.1} parent=1 // loop_header
      %s24 = sphi 0, %s28
      %p25 = scmp.ge.s32.totalorder %s24, 4
      %s34 = sphi 0, %s36
      %s37 = sphi 0, %s34
      %s38 = sphi 0, %s37
      %s54 = sphi 0, %s38
      %s58 = sphi 0, %s58
      %s60 = sphi 0, %s58
      %s61 = sphi 0, %s60
      %s75 = sphi 0, %s61
      %s79 = sphi 0, %s79
      %s81 = sphi 0, %s79
      %s82 = sphi 0, %s81
      %s96 = sphi 0, %s82
      %s100 = sphi 0, %s100
      %s102 = sphi 0, %s100
      %s103 = sphi 0, %s102
      %s117 = sphi 0, %s103
      %s121 = sphi 0, %s121
      %s123 = sphi 0, %s121
      %s124 = sphi 0, %s123
      %s138 = sphi 0, %s124
      %s142 = sphi 0, %s142
      %s144 = sphi 0, %s142
      %s145 = sphi 0, %s144
      %s159 = sphi 0, %s145
      %s163 = sphi 0, %s163
      %s165 = sphi 0, %s163
      %s166 = sphi 0, %s165
      %s180 = sphi 0, %s166
      %s184 = sphi 0, %s184
      %s186 = sphi 0, %s184
      %s187 = sphi 0, %s186
      %s201 = sphi 0, %s187
      %s207 = sphi 0, %s209
      %s210 = sphi 0, %s207
      %s211 = sphi 0, %s210
      %s227 = sphi 0, %s211
    $region4: #{tpu_custom_call.1} parent=1 // loop_header_branch
      %27 = sbr.rel (%p25) target = $region8
    $region5: #{tpu_custom_call.1} parent=1 // loop_body
      %s29 = ssub.s32 %s24, 1
      %s30 = ssub.s32 %s24, 2
      %s31 = sadd.s32 %s24, 1
      %s32 = ssub.s32 %s24, %s31
      %p33 = scmp.eq.s32.totalorder %s32, 0
      %s35 = sadd.s32 %s34, 1
      %s36 = scalar_select %p33, %s34, %s35
      %p39 = pneg %p33
      %p40 = scmp.eq.s32.totalorder %s24, 1
      %p41 = por %p39, %p40
      %p42 = scmp.ne.s32.totalorder %s34, %s37
      %p43 = scmp.eq.s32.totalorder %s24, 0
      %p44 = por %p42, %p43
      %p45 = scmp.ne.s32.totalorder %s34, %s37
      %p46 = scmp.eq.s32.totalorder %s29, 1
      %p47 = por %p45, %p46
      %p48 = scmp.ne.s32.totalorder %s37, %s38
      %p49 = scmp.eq.s32.totalorder %s29, 0
      %p50 = por %p48, %p49
      %p51 = scmp.ne.s32.totalorder %s37, %s38
      %p52 = scmp.eq.s32.totalorder %s30, 1
      %p53 = por %p51, %p52
      %p55 = scmp.ne.s32.totalorder %s38, %s54
      %p56 = scmp.eq.s32.totalorder %s30, 0
      %p57 = por %p55, %p56
      %s59 = sadd.s32 %s58, 1
      %p62 = scmp.eq.s32.totalorder %s24, 1
      %p63 = scmp.ne.s32.totalorder %s58, %s60
      %p64 = scmp.eq.s32.totalorder %s24, 0
      %p65 = por %p63, %p64
      %p66 = scmp.ne.s32.totalorder %s58, %s60
      %p67 = scmp.eq.s32.totalorder %s29, 1
      %p68 = por %p66, %p67
      %p69 = scmp.ne.s32.totalorder %s60, %s61
      %p70 = scmp.eq.s32.totalorder %s29, 0
      %p71 = por %p69, %p70
      %p72 = scmp.ne.s32.totalorder %s60, %s61
      %p73 = scmp.eq.s32.totalorder %s30, 1
      %p74 = por %p72, %p73
      %p76 = scmp.ne.s32.totalorder %s61, %s75
      %p77 = scmp.eq.s32.totalorder %s30, 0
      %p78 = por %p76, %p77
      %s80 = sadd.s32 %s79, 1
      %p83 = scmp.eq.s32.totalorder %s24, 1
      %p84 = scmp.ne.s32.totalorder %s79, %s81
      %p85 = scmp.eq.s32.totalorder %s24, 0
      %p86 = por %p84, %p85
      %p87 = scmp.ne.s32.totalorder %s79, %s81
      %p88 = scmp.eq.s32.totalorder %s29, 1
      %p89 = por %p87, %p88
      %p90 = scmp.ne.s32.totalorder %s81, %s82
      %p91 = scmp.eq.s32.totalorder %s29, 0
      %p92 = por %p90, %p91
      %p93 = scmp.ne.s32.totalorder %s81, %s82
      %p94 = scmp.eq.s32.totalorder %s30, 1
      %p95 = por %p93, %p94
      %p97 = scmp.ne.s32.totalorder %s82, %s96
      %p98 = scmp.eq.s32.totalorder %s30, 0
      %p99 = por %p97, %p98
      %s101 = sadd.s32 %s100, 1
      %p104 = scmp.eq.s32.totalorder %s24, 1
      %p105 = scmp.ne.s32.totalorder %s100, %s102
      %p106 = scmp.eq.s32.totalorder %s24, 0
      %p107 = por %p105, %p106
      %p108 = scmp.ne.s32.totalorder %s100, %s102
      %p109 = scmp.eq.s32.totalorder %s29, 1
      %p110 = por %p108, %p109
      %p111 = scmp.ne.s32.totalorder %s102, %s103
      %p112 = scmp.eq.s32.totalorder %s29, 0
      %p113 = por %p111, %p112
      %p114 = scmp.ne.s32.totalorder %s102, %s103
      %p115 = scmp.eq.s32.totalorder %s30, 1
      %p116 = por %p114, %p115
      %p118 = scmp.ne.s32.totalorder %s103, %s117
      %p119 = scmp.eq.s32.totalorder %s30, 0
      %p120 = por %p118, %p119
      %s122 = sadd.s32 %s121, 1
      %p125 = scmp.eq.s32.totalorder %s24, 1
      %p126 = scmp.ne.s32.totalorder %s121, %s123
      %p127 = scmp.eq.s32.totalorder %s24, 0
      %p128 = por %p126, %p127
      %p129 = scmp.ne.s32.totalorder %s121, %s123
      %p130 = scmp.eq.s32.totalorder %s29, 1
      %p131 = por %p129, %p130
      %p132 = scmp.ne.s32.totalorder %s123, %s124
      %p133 = scmp.eq.s32.totalorder %s29, 0
      %p134 = por %p132, %p133
      %p135 = scmp.ne.s32.totalorder %s123, %s124
      %p136 = scmp.eq.s32.totalorder %s30, 1
      %p137 = por %p135, %p136
      %p139 = scmp.ne.s32.totalorder %s124, %s138
      %p140 = scmp.eq.s32.totalorder %s30, 0
      %p141 = por %p139, %p140
      %s143 = sadd.s32 %s142, 1
      %p146 = scmp.eq.s32.totalorder %s24, 1
      %p147 = scmp.ne.s32.totalorder %s142, %s144
      %p148 = scmp.eq.s32.totalorder %s24, 0
      %p149 = por %p147, %p148
      %p150 = scmp.ne.s32.totalorder %s142, %s144
      %p151 = scmp.eq.s32.totalorder %s29, 1
      %p152 = por %p150, %p151
      %p153 = scmp.ne.s32.totalorder %s144, %s145
      %p154 = scmp.eq.s32.totalorder %s29, 0
      %p155 = por %p153, %p154
      %p156 = scmp.ne.s32.totalorder %s144, %s145
      %p157 = scmp.eq.s32.totalorder %s30, 1
      %p158 = por %p156, %p157
      %p160 = scmp.ne.s32.totalorder %s145, %s159
      %p161 = scmp.eq.s32.totalorder %s30, 0
      %p162 = por %p160, %p161
      %s164 = sadd.s32 %s163, 1
      %p167 = scmp.eq.s32.totalorder %s24, 1
      %p168 = scmp.ne.s32.totalorder %s163, %s165
      %p169 = scmp.eq.s32.totalorder %s24, 0
      %p170 = por %p168, %p169
      %p171 = scmp.ne.s32.totalorder %s163, %s165
      %p172 = scmp.eq.s32.totalorder %s29, 1
      %p173 = por %p171, %p172
      %p174 = scmp.ne.s32.totalorder %s165, %s166
      %p175 = scmp.eq.s32.totalorder %s29, 0
      %p176 = por %p174, %p175
      %p177 = scmp.ne.s32.totalorder %s165, %s166
      %p178 = scmp.eq.s32.totalorder %s30, 1
      %p179 = por %p177, %p178
      %p181 = scmp.ne.s32.totalorder %s166, %s180
      %p182 = scmp.eq.s32.totalorder %s30, 0
      %p183 = por %p181, %p182
      %s185 = sadd.s32 %s184, 1
      %p188 = scmp.eq.s32.totalorder %s24, 1
      %p189 = scmp.ne.s32.totalorder %s184, %s186
      %p190 = scmp.eq.s32.totalorder %s24, 0
      %p191 = por %p189, %p190
      %p192 = scmp.ne.s32.totalorder %s184, %s186
      %p193 = scmp.eq.s32.totalorder %s29, 1
      %p194 = por %p192, %p193
      %p195 = scmp.ne.s32.totalorder %s186, %s187
      %p196 = scmp.eq.s32.totalorder %s29, 0
      %p197 = por %p195, %p196
      %p198 = scmp.ne.s32.totalorder %s186, %s187
      %p199 = scmp.eq.s32.totalorder %s30, 1
      %p200 = por %p198, %p199
      %p202 = scmp.ne.s32.totalorder %s187, %s201
      %p203 = scmp.eq.s32.totalorder %s30, 0
      %p204 = por %p202, %p203
      %s205 = ssub.s32 %s24, %s31
      %p206 = scmp.eq.s32.totalorder %s205, 0
      %s208 = sadd.s32 %s207, 1
      %s209 = scalar_select %p206, %s207, %s208
      %p212 = pneg %p206
      %p213 = scmp.eq.s32.totalorder %s24, 1
      %p214 = por %p212, %p213
      %p215 = scmp.ne.s32.totalorder %s207, %s210
      %p216 = scmp.eq.s32.totalorder %s24, 0
      %p217 = por %p215, %p216
      %p218 = scmp.ne.s32.totalorder %s207, %s210
      %p219 = scmp.eq.s32.totalorder %s29, 1
      %p220 = por %p218, %p219
      %p221 = scmp.ne.s32.totalorder %s210, %s211
      %p222 = scmp.eq.s32.totalorder %s29, 0
      %p223 = por %p221, %p222
      %p224 = scmp.ne.s32.totalorder %s210, %s211
      %p225 = scmp.eq.s32.totalorder %s30, 1
      %p226 = por %p224, %p225
      %p228 = scmp.ne.s32.totalorder %s211, %s227
      %p229 = scmp.eq.s32.totalorder %s30, 0
      %p230 = por %p228, %p229
      %p231 = scmp.le.s32.totalorder 1, %s24
      %p232 = scmp.lt.s32.totalorder %s24, 3
      %p233 = pnand %p231, %p232
      %p234 = pneg %p233
      // Predicated region
      $region9: #{tpu_custom_call.1} parent=5 // pred_check
        _
      $region10: #{tpu_custom_call.1} parent=5 // pred_check_branch
        %236 = sbr.rel (%p233) target = $region12
      $region11: #{tpu_custom_call.1} parent=5 // pred_region
        %s237 = ssub.s32 %s24, 1
        // Predicated region
        $region13: #{tpu_custom_call.1} parent=11 // pred_check
          %p238 = pneg %p71
        $region14: #{tpu_custom_call.1} parent=11 // pred_check_branch
          %240 = sbr.rel (%p238) target = $region16
        $region15: #{tpu_custom_call.1} parent=11 // pred_region
          %s242 = ssub.s32 512, 512
          %243 = vsyncadd [#allocation6], %s242
          %s244 = sshll.u32 [#allocation5], 4
          %s245 = int_to_ptr.vmem [resolvable:$true] %s244
          %250 = dma.hbm_to_vmem [thread:$0]  %s1, 512, %s245, [#allocation6], 256, 256, 16
        $region16: #{tpu_custom_call.1} parent=11 // pred_fallthru
          _
        // Predicated region
        $region17: #{tpu_custom_call.1} parent=11 // pred_check
          %p251 = pneg %p92
        $region18: #{tpu_custom_call.1} parent=11 // pred_check_branch
          %253 = sbr.rel (%p251) target = $region20
        $region19: #{tpu_custom_call.1} parent=11 // pred_region
          %s255 = ssub.s32 128, 128
          %256 = vsyncadd [#allocation6], %s255
          %s258 = sshll.u32 [#allocation7], 4
          %s259 = int_to_ptr.vmem [resolvable:$true] %s258
          %261 = dma.hbm_to_vmem [thread:$0]  %s2, 128, %s259, [#allocation6]
        $region20: #{tpu_custom_call.1} parent=11 // pred_fallthru
          _
        // Predicated region
        $region21: #{tpu_custom_call.1} parent=11 // pred_check
          %p262 = pneg %p113
        $region22: #{tpu_custom_call.1} parent=11 // pred_check_branch
          %264 = sbr.rel (%p262) target = $region24
        $region23: #{tpu_custom_call.1} parent=11 // pred_region
          %s266 = ssub.s32 128, 128
          %267 = vsyncadd [#allocation9], %s266
          %s269 = sshll.u32 [#allocation8], 4
          %s270 = int_to_ptr.vmem [resolvable:$true] %s269
          %272 = dma.hbm_to_vmem [thread:$0]  %s3, 128, %s270, [#allocation9]
        $region24: #{tpu_custom_call.1} parent=11 // pred_fallthru
          _
        // Predicated region
        $region25: #{tpu_custom_call.1} parent=11 // pred_check
          %p273 = pneg %p134
        $region26: #{tpu_custom_call.1} parent=11 // pred_check_branch
          %275 = sbr.rel (%p273) target = $region28
        $region27: #{tpu_custom_call.1} parent=11 // pred_region
          %s277 = ssub.s32 128, 128
          %278 = vsyncadd [#allocation9], %s277
          %s280 = sshll.u32 [#allocation10], 4
          %s281 = int_to_ptr.vmem [resolvable:$true] %s280
          %283 = dma.hbm_to_vmem [thread:$0]  %s4, 128, %s281, [#allocation9]
        $region28: #{tpu_custom_call.1} parent=11 // pred_fallthru
          _
        // Predicated region
        $region29: #{tpu_custom_call.1} parent=11 // pred_check
          %p284 = pneg %p155
        $region30: #{tpu_custom_call.1} parent=11 // pred_check_branch
          %286 = sbr.rel (%p284) target = $region32
        $region31: #{tpu_custom_call.1} parent=11 // pred_region
          %s288 = ssub.s32 128, 128
          %289 = vsyncadd [#allocation12], %s288
          %s291 = sshll.u32 [#allocation11], 4
          %s292 = int_to_ptr.vmem [resolvable:$true] %s291
          %294 = dma.hbm_to_vmem [thread:$0]  %s5, 128, %s292, [#allocation12]
        $region32: #{tpu_custom_call.1} parent=11 // pred_fallthru
          _
        // Predicated region
        $region33: #{tpu_custom_call.1} parent=11 // pred_check
          %p295 = pneg %p176
        $region34: #{tpu_custom_call.1} parent=11 // pred_check_branch
          %297 = sbr.rel (%p295) target = $region36
        $region35: #{tpu_custom_call.1} parent=11 // pred_region
          %s299 = ssub.s32 512, 512
          %300 = vsyncadd [#allocation12], %s299
          %s301 = sshll.u32 [#allocation13], 4
          %s302 = int_to_ptr.vmem [resolvable:$true] %s301
          %307 = dma.hbm_to_vmem [thread:$0]  %s6, 512, %s302, [#allocation12], 128, 128, 8
        $region36: #{tpu_custom_call.1} parent=11 // pred_fallthru
          _
        // Predicated region
        $region37: #{tpu_custom_call.1} parent=11 // pred_check
          %p308 = pneg %p197
        $region38: #{tpu_custom_call.1} parent=11 // pred_check_branch
          %310 = sbr.rel (%p308) target = $region40
        $region39: #{tpu_custom_call.1} parent=11 // pred_region
          %s312 = ssub.s32 512, 512
          %313 = vsyncadd [#allocation15], %s312
          %s314 = sshll.u32 [#allocation14], 4
          %s315 = int_to_ptr.vmem [resolvable:$true] %s314
          %320 = dma.hbm_to_vmem [thread:$0]  %s7, 512, %s315, [#allocation15], 128, 128, 8
        $region40: #{tpu_custom_call.1} parent=11 // pred_fallthru
          _
      $region12: #{tpu_custom_call.1} parent=5 // pred_fallthru
        _
      %p321 = scmp.lt.s32.totalorder %s24, 2
      // Predicated region
      $region41: #{tpu_custom_call.1} parent=5 // pred_check
        %p322 = pneg %p321
      $region42: #{tpu_custom_call.1} parent=5 // pred_check_branch
        %324 = sbr.rel (%p322) target = $region44
      $region43: #{tpu_custom_call.1} parent=5 // pred_region
        // Predicated region
        $region45: #{tpu_custom_call.1} parent=43 // pred_check
          %p325 = pneg %p44
        $region46: #{tpu_custom_call.1} parent=43 // pred_check_branch
          %327 = sbr.rel (%p325) target = $region48
        $region47: #{tpu_custom_call.1} parent=43 // pred_region
          %s328 = sand.u32 %s34, 1
          %s329 = scalar_lea.sflag [#allocation3], %s328
          %s330 = sand.u32 %s34, 1
          %s331 = smul.addr %s330, 64
          %s332 = scalar_lea.vmem [#allocation2], %s331
          %s334 = ssub.s32 1024, 1024
          %335 = vsyncadd %s329, %s334
          %s336 = smul.addr %s24, 8
          %s337 = smul.addr %s336, 128
          %s338 = scalar_lea.hbm %s0, %s337
          %s339 = sshll.u32 %s332, 4
          %s340 = int_to_ptr.vmem [resolvable:$true] %s339
          %345 = dma.hbm_to_vmem [thread:$0]  %s338, 1024, %s340, %s329, 256, 256, 16
        $region48: #{tpu_custom_call.1} parent=43 // pred_fallthru
          _
      $region44: #{tpu_custom_call.1} parent=5 // pred_fallthru
        _
      %p346 = scmp.le.s32.totalorder 1, %s24
      %p347 = scmp.lt.s32.totalorder %s24, 3
      %p348 = pnand %p346, %p347
      %p349 = pneg %p348
      // Predicated region
      $region49: #{tpu_custom_call.1} parent=5 // pred_check
        _
      $region50: #{tpu_custom_call.1} parent=5 // pred_check_branch
        %351 = sbr.rel (%p348) target = $region52
      $region51: #{tpu_custom_call.1} parent=5 // pred_region
        %s352 = ssub.s32 %s24, 1
        %s353 = sand.u32 %s37, 1
        %s354 = scalar_lea.sflag [#allocation3], %s353
        %s355 = sand.u32 %s37, 1
        %s356 = smul.addr %s355, 64
        %s357 = scalar_lea.vmem [#allocation2], %s356
        // Predicated region
        $region53: #{tpu_custom_call.1} parent=51 // pred_check
          %p358 = pneg %p50
        $region54: #{tpu_custom_call.1} parent=51 // pred_check_branch
          %360 = sbr.rel (%p358) target = $region56
        $region55: #{tpu_custom_call.1} parent=51 // pred_region
          %361 = dma.done %s354, 1024
        $region56: #{tpu_custom_call.1} parent=51 // pred_fallthru
          _
        // Predicated region
        $region57: #{tpu_custom_call.1} parent=51 // pred_check
          %p362 = pneg %p71
        $region58: #{tpu_custom_call.1} parent=51 // pred_check_branch
          %364 = sbr.rel (%p362) target = $region60
        $region59: #{tpu_custom_call.1} parent=51 // pred_region
          %365 = dma.done [#allocation6], 512
        $region60: #{tpu_custom_call.1} parent=51 // pred_fallthru
          _
        // Predicated region
        $region61: #{tpu_custom_call.1} parent=51 // pred_check
          %p366 = pneg %p92
        $region62: #{tpu_custom_call.1} parent=51 // pred_check_branch
          %368 = sbr.rel (%p366) target = $region64
        $region63: #{tpu_custom_call.1} parent=51 // pred_region
          %369 = dma.done [#allocation6], 128
        $region64: #{tpu_custom_call.1} parent=51 // pred_fallthru
          _
        // Predicated region
        $region65: #{tpu_custom_call.1} parent=51 // pred_check
          %p370 = pneg %p113
        $region66: #{tpu_custom_call.1} parent=51 // pred_check_branch
          %372 = sbr.rel (%p370) target = $region68
        $region67: #{tpu_custom_call.1} parent=51 // pred_region
          %373 = dma.done [#allocation9], 128
        $region68: #{tpu_custom_call.1} parent=51 // pred_fallthru
          _
        // Predicated region
        $region69: #{tpu_custom_call.1} parent=51 // pred_check
          %p374 = pneg %p134
        $region70: #{tpu_custom_call.1} parent=51 // pred_check_branch
          %376 = sbr.rel (%p374) target = $region72
        $region71: #{tpu_custom_call.1} parent=51 // pred_region
          %377 = dma.done [#allocation9], 128
        $region72: #{tpu_custom_call.1} parent=51 // pred_fallthru
          _
        // Predicated region
        $region73: #{tpu_custom_call.1} parent=51 // pred_check
          %p378 = pneg %p155
        $region74: #{tpu_custom_call.1} parent=51 // pred_check_branch
          %380 = sbr.rel (%p378) target = $region76
        $region75: #{tpu_custom_call.1} parent=51 // pred_region
          %381 = dma.done [#allocation12], 128
        $region76: #{tpu_custom_call.1} parent=51 // pred_fallthru
          _
        // Predicated region
        $region77: #{tpu_custom_call.1} parent=51 // pred_check
          %p382 = pneg %p176
        $region78: #{tpu_custom_call.1} parent=51 // pred_check_branch
          %384 = sbr.rel (%p382) target = $region80
        $region79: #{tpu_custom_call.1} parent=51 // pred_region
          %385 = dma.done [#allocation12], 512
        $region80: #{tpu_custom_call.1} parent=51 // pred_fallthru
          _
        // Predicated region
        $region81: #{tpu_custom_call.1} parent=51 // pred_check
          %p386 = pneg %p197
        $region82: #{tpu_custom_call.1} parent=51 // pred_check_branch
          %388 = sbr.rel (%p386) target = $region84
        $region83: #{tpu_custom_call.1} parent=51 // pred_region
          %389 = dma.done [#allocation15], 512
        $region84: #{tpu_custom_call.1} parent=51 // pred_fallthru
          _
        %s390 = sand.u32 %s37, 1
        %s391 = scalar_lea.sflag [#allocation3], %s390
        %s392 = sand.u32 %s37, 1
        %s393 = smul.addr %s392, 64
        %s394 = scalar_lea.vmem [#allocation2], %s393
        %p395 = pneg %p50
        %p396 = pneg %p47
        %p397 = pneg %p71
        %p398 = pneg %p68
        %p399 = pneg %p92
        %p400 = pneg %p89
        %p401 = pneg %p113
        %p402 = pneg %p110
        %p403 = pneg %p134
        %p404 = pneg %p131
        %p405 = pneg %p155
        %p406 = pneg %p152
        %p407 = pneg %p176
        %p408 = pneg %p173
        %p409 = pneg %p197
        %p410 = pneg %p194
        %p411 = pneg %p223
        %p412 = pneg %p220
        %s413 = sand.u32 %s210, 1
        %s414 = scalar_lea.sflag [#allocation4], %s413
        %s415 = sand.u32 %s210, 1
        %s416 = smul.addr %s415, 64
        %s417 = scalar_lea.vmem [#allocation16], %s416
        %v418 = vld [vmem:[#allocation7] sm:$0xff]
        %v419 = vld [vmem:[#allocation13] sm:$0xff]
        %v420 = vld [vmem:[#allocation13 + $0x8] sm:$0xff]
        %v421 = vld [vmem:[#allocation13 + $0x10] sm:$0xff]
        %v422 = vld [vmem:[#allocation13 + $0x18] sm:$0xff]
        %v423 = vld [vmem:[#allocation8] sm:$0xff]
        %v424 = vld [vmem:[#allocation11] sm:$0xff]
        %v425 = vld [vmem:[#allocation14] sm:$0xff]
        %v426 = vld [vmem:[#allocation14 + $0x8] sm:$0xff]
        %v427 = vld [vmem:[#allocation14 + $0x10] sm:$0xff]
        %v428 = vld [vmem:[#allocation14 + $0x18] sm:$0xff]
        %v429 = vld [vmem:[#allocation5] sm:$0xff]
        %v430 = vld [vmem:[#allocation5 + $0x8] sm:$0xff]
        %v431 = vld [vmem:[#allocation5 + $0x10] sm:$0x1]
        %v432 = vld [vmem:[#allocation5 + $0x18] sm:$0x1]
        %v433 = vld [vmem:[#allocation10] sm:$0xff]
        %v434 = vld [vmem:[%s357] sm:$0xff]
        %v435 = vld [vmem:[%s357 + $0x8] sm:$0xff]
        %v436 = vld [vmem:[%s357 + $0x10] sm:$0xff]
        %v437 = vld [vmem:[%s357 + $0x18] sm:$0xff]
        %v438 = vld [vmem:[%s357 + $0x20] sm:$0xff]
        %v439 = vld [vmem:[%s357 + $0x28] sm:$0xff]
        %v440 = vld [vmem:[%s357 + $0x30] sm:$0xff]
        %v441 = vld [vmem:[%s357 + $0x38] sm:$0xff]
        %443 = vset.pattern.permute.xlu0 0
        %444 = vperm.xlu0 %443, %v423
        %v445 = vpop.permute.xlu0 %444
        %vm447 = vcmask 261120
        %v449 = vsel %vm447, %v418, 0
        %451 = vmatprep.subr.mxu0 %v435
        %452 = vmatpush1.msra.mxu0 %v434
        %453 = vmatprep.subr.mxu0 %v437
        %454 = vmatpush1.msra.mxu0 %v436
        %455 = vmatprep.subr.mxu0 %v439
        %456 = vmatpush1.msra.mxu0 %v438
        %457 = vmatprep.subr.mxu0 %v441
        %458 = vmatpush1.msra.mxu0 %v440
        %459 = vmatprep.subr.mxu0 0.0
        %460 = vmatpush1.msra.mxu0 0.0
        %461 = vmatprep.subr.mxu0 0.0
        %462 = vmatpush1.msra.mxu0 0.0
        %463 = vmatprep.subr.mxu0 0.0
        %464 = vmatpush1.msra.mxu0 0.0
        %465 = vmatprep.subr.mxu0 0.0
        %466 = vmatpush1.msra.mxu0 0.0
        %467 = vmatprep.subr.mxu0 0.0
        %468 = vmatpush1.msra.mxu0 0.0
        %469 = vmatprep.subr.mxu0 0.0
        %470 = vmatpush1.msra.mxu0 0.0
        %471 = vmatprep.subr.mxu0 0.0
        %472 = vmatpush1.msra.mxu0 0.0
        %473 = vmatprep.subr.mxu0 0.0
        %474 = vmatpush1.msra.mxu0 0.0
        %475 = vmatprep.subr.mxu0 0.0
        %476 = vmatpush1.msra.mxu0 0.0
        %477 = vmatprep.subr.mxu0 0.0
        %478 = vmatpush1.msra.mxu0 0.0
        %479 = vmatprep.subr.mxu0 0.0
        %480 = vmatpush1.msra.mxu0 0.0
        %481 = vmatprep.subr.mxu0 0.0
        %482 = vmatpush1.msra.mxu0 0.0
        %483 = vmatprep.subr.mxu0 0.0
        %484 = vmatpush1.msra.mxu0 0.0
        %485 = vmatprep.subr.mxu0 0.0
        %486 = vmatpush1.msra.mxu0 0.0
        %487 = vmatprep.subr.mxu0 0.0
        %488 = vmatpush1.msra.mxu0 0.0
        %489 = vmatprep.subr.mxu0 0.0
        %490 = vmatpush1.msra.mxu0 0.0
        %491 = vmatprep.subr.mxu0 0.0
        %492 = vmatpush1.msra.mxu0 0.0
        %493 = vmatprep.subr.mxu0 0.0
        %494 = vmatpush1.msra.mxu0 0.0
        %495 = vmatprep.subr.mxu0 0.0
        %496 = vmatpush1.msra.mxu0 0.0
        %497 = vmatprep.subr.mxu0 0.0
        %498 = vmatpush1.msra.mxu0 0.0
        %499 = vmatprep.subr.mxu0 0.0
        %500 = vmatpush1.msra.mxu0 0.0
        %501 = vmatprep.subr.mxu0 0.0
        %502 = vmatpush1.msra.mxu0 0.0
        %503 = vmatprep.subr.mxu0 0.0
        %504 = vmatpush1.msra.mxu0 0.0
        %505 = vmatprep.subr.mxu0 0.0
        %506 = vmatpush1.msra.mxu0 0.0
        %507 = vmatprep.subr.mxu0 0.0
        %508 = vmatpush1.msra.mxu0 0.0
        %509 = vmatprep.subr.mxu0 0.0
        %510 = vmatpush1.msra.mxu0 0.0
        %511 = vmatprep.subr.mxu0 0.0
        %512 = vmatpush1.msra.mxu0 0.0
        %513 = vmatprep.subr.mxu0 0.0
        %514 = vmatpush1.msra.mxu0 0.0
        %515 = vmatprep.mubr.f32.mxu0 0.0
        %516 = vmatmul.mubr.f32.gmra.mrb[0].mxu0 %v449
        %v517 = vpop.f32.mrb[0].mxu0
        %v518 = vadd.f32 %v445, %v517
        %v519 = vpop.f32.mrb[0].mxu0
        %v520 = vadd.f32 %v445, %v519
        %521 = vdwg.mxu0
        %v522 = vmax.f32 %v518, 0.0
        %v523 = vmax.f32 %v520, 0.0
        %524 = vrot.lane.b32.xlu0 %v522, 17
        %v525 = vpop.permute.xlu0 %524
        %526 = vrot.lane.b32.xlu0 %v523, 17
        %v527 = vpop.permute.xlu0 %526
        %v528 = vlaneseq
        %v529 = vand.u32 %v528, 127
        %vm530 = vcmp.lt.s32.totalorder %v529, 17
        %v531 = vsel %vm530, %v525, %v527
        %v532 = vsel %vm530, %v527, %v525
        %v533 = vlaneseq
        %v534 = vshrl.u32 %v533, 7
        %v535 = vsub.s32 0, %v534
        %v536 = vrot.slane %v429, %v535
        %v537 = vlaneseq
        %v538 = vshrl.u32 %v537, 7
        %v539 = vsub.s32 0, %v538
        %v540 = vrot.slane %v430, %v539
        %v541 = vmul.f32 %v532, %v536
        %v542 = vmul.f32 %v531, %v540
        %543 = vrot.lane.b32.xlu0 %v522, 16
        %v544 = vpop.permute.xlu0 %543
        %545 = vrot.lane.b32.xlu0 %v523, 16
        %v546 = vpop.permute.xlu0 %545
        %vm547 = vcmp.lt.s32.totalorder %v529, 16
        %v548 = vsel %vm547, %v544, %v546
        %v549 = vsel %vm547, %v546, %v544
        %v550 = vlaneseq
        %v551 = vshrl.u32 %v550, 7
        %v552 = vsub.s32 1, %v551
        %v553 = vrot.slane %v429, %v552
        %v554 = vlaneseq
        %v555 = vshrl.u32 %v554, 7
        %v556 = vsub.s32 1, %v555
        %v557 = vrot.slane %v430, %v556
        %v558 = vmul.f32 %v549, %v553
        %v559 = vmul.f32 %v548, %v557
        %560 = vrot.lane.b32.xlu0 %v522, 15
        %v561 = vpop.permute.xlu0 %560
        %562 = vrot.lane.b32.xlu0 %v523, 15
        %v563 = vpop.permute.xlu0 %562
        %vm564 = vcmp.lt.s32.totalorder %v529, 15
        %v565 = vsel %vm564, %v561, %v563
        %v566 = vsel %vm564, %v563, %v561
        %v567 = vlaneseq
        %v568 = vshrl.u32 %v567, 7
        %v569 = vsub.s32 2, %v568
        %v570 = vrot.slane %v429, %v569
        %v571 = vlaneseq
        %v572 = vshrl.u32 %v571, 7
        %v573 = vsub.s32 2, %v572
        %v574 = vrot.slane %v430, %v573
        %v575 = vmul.f32 %v566, %v570
        %v576 = vmul.f32 %v565, %v574
        %577 = vrot.lane.b32.xlu0 %v522, 1
        %v578 = vpop.permute.xlu0 %577
        %579 = vrot.lane.b32.xlu0 %v523, 1
        %v580 = vpop.permute.xlu0 %579
        %vm581 = vcmp.lt.s32.totalorder %v529, 1
        %v582 = vsel %vm581, %v578, %v580
        %v583 = vsel %vm581, %v580, %v578
        %v584 = vlaneseq
        %v585 = vshrl.u32 %v584, 7
        %v586 = vsub.s32 3, %v585
        %v587 = vrot.slane %v429, %v586
        %v588 = vlaneseq
        %v589 = vshrl.u32 %v588, 7
        %v590 = vsub.s32 3, %v589
        %v591 = vrot.slane %v430, %v590
        %v592 = vmul.f32 %v583, %v587
        %v593 = vmul.f32 %v582, %v591
        %v594 = vlaneseq
        %v595 = vshrl.u32 %v594, 7
        %v596 = vsub.s32 4, %v595
        %v597 = vrot.slane %v429, %v596
        %v598 = vlaneseq
        %v599 = vshrl.u32 %v598, 7
        %v600 = vsub.s32 4, %v599
        %v601 = vrot.slane %v430, %v600
        %v602 = vmul.f32 %v522, %v597
        %v603 = vmul.f32 %v523, %v601
        %604 = vrot.lane.b32.xlu0 %v522, 127
        %v605 = vpop.permute.xlu0 %604
        %606 = vrot.lane.b32.xlu0 %v523, 127
        %v607 = vpop.permute.xlu0 %606
        %vm608 = vcmp.lt.s32.totalorder %v529, 127
        %v609 = vsel %vm608, %v605, %v607
        %v610 = vsel %vm608, %v607, %v605
        %v611 = vlaneseq
        %v612 = vshrl.u32 %v611, 7
        %v613 = vsub.s32 5, %v612
        %v614 = vrot.slane %v429, %v613
        %v615 = vlaneseq
        %v616 = vshrl.u32 %v615, 7
        %v617 = vsub.s32 5, %v616
        %v618 = vrot.slane %v430, %v617
        %v619 = vmul.f32 %v609, %v614
        %v620 = vmul.f32 %v610, %v618
        %621 = vrot.lane.b32.xlu0 %v522, 113
        %v622 = vpop.permute.xlu0 %621
        %623 = vrot.lane.b32.xlu0 %v523, 113
        %v624 = vpop.permute.xlu0 %623
        %vm625 = vcmp.lt.s32.totalorder %v529, 113
        %v626 = vsel %vm625, %v622, %v624
        %v627 = vsel %vm625, %v624, %v622
        %v628 = vlaneseq
        %v629 = vshrl.u32 %v628, 7
        %v630 = vsub.s32 6, %v629
        %v631 = vrot.slane %v429, %v630
        %v632 = vlaneseq
        %v633 = vshrl.u32 %v632, 7
        %v634 = vsub.s32 6, %v633
        %v635 = vrot.slane %v430, %v634
        %v636 = vmul.f32 %v626, %v631
        %v637 = vmul.f32 %v627, %v635
        %638 = vrot.lane.b32.xlu0 %v522, 112
        %v639 = vpop.permute.xlu0 %638
        %640 = vrot.lane.b32.xlu0 %v523, 112
        %v641 = vpop.permute.xlu0 %640
        %vm642 = vcmp.lt.s32.totalorder %v529, 112
        %v643 = vsel %vm642, %v639, %v641
        %v644 = vsel %vm642, %v641, %v639
        %v645 = vlaneseq
        %v646 = vshrl.u32 %v645, 7
        %v647 = vsub.s32 7, %v646
        %v648 = vrot.slane %v429, %v647
        %v649 = vlaneseq
        %v650 = vshrl.u32 %v649, 7
        %v651 = vsub.s32 7, %v650
        %v652 = vrot.slane %v430, %v651
        %v653 = vmul.f32 %v643, %v648
        %v654 = vmul.f32 %v644, %v652
        %655 = vrot.lane.b32.xlu0 %v522, 111
        %v656 = vpop.permute.xlu0 %655
        %657 = vrot.lane.b32.xlu0 %v523, 111
        %v658 = vpop.permute.xlu0 %657
        %vm659 = vcmp.lt.s32.totalorder %v529, 111
        %v660 = vsel %vm659, %v656, %v658
        %v661 = vsel %vm659, %v658, %v656
        %v662 = vlaneseq
        %v663 = vshrl.u32 %v662, 7
        %v664 = vsub.s32 0, %v663
        %v665 = vrot.slane %v431, %v664
        %v666 = vlaneseq
        %v667 = vshrl.u32 %v666, 7
        %v668 = vsub.s32 0, %v667
        %v669 = vrot.slane %v432, %v668
        %v670 = vmul.f32 %v660, %v665
        %v671 = vmul.f32 %v661, %v669
        %673 = vset.pattern.permute.xlu0 0
        %674 = vperm.xlu0 %673, %v424
        %v675 = vpop.permute.xlu0 %674
        %vm677 = vcmask 588800
        %v679 = vsel %vm677, %v433, 0
        %681 = vmatprep.subr.mxu0 %v542
        %682 = vmatpush1.msra.mxu0 %v541
        %683 = vmatprep.subr.mxu0 %v559
        %684 = vmatpush1.msra.mxu0 %v558
        %685 = vmatprep.subr.mxu0 %v576
        %686 = vmatpush1.msra.mxu0 %v575
        %687 = vmatprep.subr.mxu0 %v593
        %688 = vmatpush1.msra.mxu0 %v592
        %689 = vmatprep.subr.mxu0 %v603
        %690 = vmatpush1.msra.mxu0 %v602
        %691 = vmatprep.subr.mxu0 %v620
        %692 = vmatpush1.msra.mxu0 %v619
        %693 = vmatprep.subr.mxu0 %v637
        %694 = vmatpush1.msra.mxu0 %v636
        %695 = vmatprep.subr.mxu0 %v654
        %696 = vmatpush1.msra.mxu0 %v653
        %697 = vmatprep.subr.mxu0 %v671
        %698 = vmatpush1.msra.mxu0 %v670
        %699 = vmatprep.subr.mxu0 0.0
        %700 = vmatpush1.msra.mxu0 0.0
        %701 = vmatprep.subr.mxu0 0.0
        %702 = vmatpush1.msra.mxu0 0.0
        %703 = vmatprep.subr.mxu0 0.0
        %704 = vmatpush1.msra.mxu0 0.0
        %705 = vmatprep.subr.mxu0 0.0
        %706 = vmatpush1.msra.mxu0 0.0
        %707 = vmatprep.subr.mxu0 0.0
        %708 = vmatpush1.msra.mxu0 0.0
        %709 = vmatprep.subr.mxu0 0.0
        %710 = vmatpush1.msra.mxu0 0.0
        %711 = vmatprep.subr.mxu0 0.0
        %712 = vmatpush1.msra.mxu0 0.0
        %713 = vmatprep.subr.mxu0 0.0
        %714 = vmatpush1.msra.mxu0 0.0
        %715 = vmatprep.subr.mxu0 0.0
        %716 = vmatpush1.msra.mxu0 0.0
        %717 = vmatprep.subr.mxu0 0.0
        %718 = vmatpush1.msra.mxu0 0.0
        %719 = vmatprep.subr.mxu0 0.0
        %720 = vmatpush1.msra.mxu0 0.0
        %721 = vmatprep.subr.mxu0 0.0
        %722 = vmatpush1.msra.mxu0 0.0
        %723 = vmatprep.subr.mxu0 0.0
        %724 = vmatpush1.msra.mxu0 0.0
        %725 = vmatprep.subr.mxu0 0.0
        %726 = vmatpush1.msra.mxu0 0.0
        %727 = vmatprep.subr.mxu0 0.0
        %728 = vmatpush1.msra.mxu0 0.0
        %729 = vmatprep.subr.mxu0 0.0
        %730 = vmatpush1.msra.mxu0 0.0
        %731 = vmatprep.subr.mxu0 0.0
        %732 = vmatpush1.msra.mxu0 0.0
        %733 = vmatprep.subr.mxu0 0.0
        %734 = vmatpush1.msra.mxu0 0.0
        %735 = vmatprep.subr.mxu0 0.0
        %736 = vmatpush1.msra.mxu0 0.0
        %737 = vmatprep.subr.mxu0 0.0
        %738 = vmatpush1.msra.mxu0 0.0
        %739 = vmatprep.subr.mxu0 0.0
        %740 = vmatpush1.msra.mxu0 0.0
        %741 = vmatprep.subr.mxu0 0.0
        %742 = vmatpush1.msra.mxu0 0.0
        %743 = vmatprep.subr.mxu0 0.0
        %744 = vmatpush1.msra.mxu0 0.0
        %745 = vmatprep.mubr.f32.mxu0 0.0
        %746 = vmatmul.mubr.f32.gmra.mrb[0].mxu0 %v679
        %v747 = vpop.f32.mrb[0].mxu0
        %v748 = vadd.f32 %v675, %v747
        %v749 = vpop.f32.mrb[0].mxu0
        %v750 = vadd.f32 %v675, %v749
        %751 = vdwg.mxu0
        %v752 = vmax.f32 %v748, 0.0
        %v753 = vmax.f32 %v750, 0.0
        %755 = vset.pattern.permute.xlu0 0
        %756 = vperm.xlu0 %755, %v425
        %v757 = vpop.permute.xlu0 %756
        %760 = vset.pattern.permute.xlu0 0
        %761 = vperm.xlu0 %760, %v426
        %v762 = vpop.permute.xlu0 %761
        %765 = vset.pattern.permute.xlu0 0
        %766 = vperm.xlu0 %765, %v427
        %v767 = vpop.permute.xlu0 %766
        %770 = vset.pattern.permute.xlu0 0
        %771 = vperm.xlu0 %770, %v428
        %v772 = vpop.permute.xlu0 %771
        %vm774 = vcmask 64512
        %v776 = vsel %vm774, %v419, 0
        %v779 = vsel %vm774, %v420, 0
        %v782 = vsel %vm774, %v421, 0
        %v785 = vsel %vm774, %v422, 0
        %787 = vmatprep.subr.mxu0 %v753
        %788 = vmatpush1.msra.mxu0 %v752
        %789 = vmatprep.subr.mxu0 0.0
        %790 = vmatpush1.msra.mxu0 0.0
        %791 = vmatprep.subr.mxu0 0.0
        %792 = vmatpush1.msra.mxu0 0.0
        %793 = vmatprep.subr.mxu0 0.0
        %794 = vmatpush1.msra.mxu0 0.0
        %795 = vmatprep.subr.mxu0 0.0
        %796 = vmatpush1.msra.mxu0 0.0
        %797 = vmatprep.subr.mxu0 0.0
        %798 = vmatpush1.msra.mxu0 0.0
        %799 = vmatprep.subr.mxu0 0.0
        %800 = vmatpush1.msra.mxu0 0.0
        %801 = vmatprep.subr.mxu0 0.0
        %802 = vmatpush1.msra.mxu0 0.0
        %803 = vmatprep.subr.mxu0 0.0
        %804 = vmatpush1.msra.mxu0 0.0
        %805 = vmatprep.subr.mxu0 0.0
        %806 = vmatpush1.msra.mxu0 0.0
        %807 = vmatprep.subr.mxu0 0.0
        %808 = vmatpush1.msra.mxu0 0.0
        %809 = vmatprep.subr.mxu0 0.0
        %810 = vmatpush1.msra.mxu0 0.0
        %811 = vmatprep.subr.mxu0 0.0
        %812 = vmatpush1.msra.mxu0 0.0
        %813 = vmatprep.subr.mxu0 0.0
        %814 = vmatpush1.msra.mxu0 0.0
        %815 = vmatprep.subr.mxu0 0.0
        %816 = vmatpush1.msra.mxu0 0.0
        %817 = vmatprep.subr.mxu0 0.0
        %818 = vmatpush1.msra.mxu0 0.0
        %819 = vmatprep.subr.mxu0 0.0
        %820 = vmatpush1.msra.mxu0 0.0
        %821 = vmatprep.subr.mxu0 0.0
        %822 = vmatpush1.msra.mxu0 0.0
        %823 = vmatprep.subr.mxu0 0.0
        %824 = vmatpush1.msra.mxu0 0.0
        %825 = vmatprep.subr.mxu0 0.0
        %826 = vmatpush1.msra.mxu0 0.0
        %827 = vmatprep.subr.mxu0 0.0
        %828 = vmatpush1.msra.mxu0 0.0
        %829 = vmatprep.subr.mxu0 0.0
        %830 = vmatpush1.msra.mxu0 0.0
        %831 = vmatprep.subr.mxu0 0.0
        %832 = vmatpush1.msra.mxu0 0.0
        %833 = vmatprep.subr.mxu0 0.0
        %834 = vmatpush1.msra.mxu0 0.0
        %835 = vmatprep.subr.mxu0 0.0
        %836 = vmatpush1.msra.mxu0 0.0
        %837 = vmatprep.subr.mxu0 0.0
        %838 = vmatpush1.msra.mxu0 0.0
        %839 = vmatprep.subr.mxu0 0.0
        %840 = vmatpush1.msra.mxu0 0.0
        %841 = vmatprep.subr.mxu0 0.0
        %842 = vmatpush1.msra.mxu0 0.0
        %843 = vmatprep.subr.mxu0 0.0
        %844 = vmatpush1.msra.mxu0 0.0
        %845 = vmatprep.subr.mxu0 0.0
        %846 = vmatpush1.msra.mxu0 0.0
        %847 = vmatprep.subr.mxu0 0.0
        %848 = vmatpush1.msra.mxu0 0.0
        %849 = vmatprep.subr.mxu0 0.0
        %850 = vmatpush1.msra.mxu0 0.0
        %851 = vmatprep.mubr.f32.mxu0 0.0
        %852 = vmatmul.mubr.f32.gmra.mrb[0].mxu0 %v776
        %v853 = vpop.f32.mrb[0].mxu0
        %v854 = vadd.f32 %v757, %v853
        %v855 = vpop.f32.mrb[0].mxu0
        %v856 = vadd.f32 %v757, %v855
        %857 = vmatprep.mubr.f32.mxu0 0.0
        %858 = vmatmul.mubr.f32.gmra.mrb[0].mxu0 %v779
        %v859 = vpop.f32.mrb[0].mxu0
        %v860 = vadd.f32 %v762, %v859
        %v861 = vpop.f32.mrb[0].mxu0
        %v862 = vadd.f32 %v762, %v861
        %863 = vmatprep.mubr.f32.mxu0 0.0
        %864 = vmatmul.mubr.f32.gmra.mrb[0].mxu0 %v782
        %v865 = vpop.f32.mrb[0].mxu0
        %v866 = vadd.f32 %v767, %v865
        %v867 = vpop.f32.mrb[0].mxu0
        %v868 = vadd.f32 %v767, %v867
        %869 = vmatprep.mubr.f32.mxu0 0.0
        %870 = vmatmul.mubr.f32.gmra.mrb[0].mxu0 %v785
        %v871 = vpop.f32.mrb[0].mxu0
        %v872 = vadd.f32 %v772, %v871
        %v873 = vpop.f32.mrb[0].mxu0
        %v874 = vadd.f32 %v772, %v873
        %875 = vdwg.mxu0
        %v876 = vadd.f32 %v854, %v434
        %v877 = vadd.f32 %v856, %v435
        %v878 = vadd.f32 %v860, %v436
        %v879 = vadd.f32 %v862, %v437
        %v880 = vadd.f32 %v866, %v438
        %v881 = vadd.f32 %v868, %v439
        %v882 = vadd.f32 %v872, %v440
        %v883 = vadd.f32 %v874, %v441
        %v884 = vmax.f32 %v876, 0.0
        %v885 = vmax.f32 %v877, 0.0
        %v886 = vmax.f32 %v878, 0.0
        %v887 = vmax.f32 %v879, 0.0
        %v888 = vmax.f32 %v880, 0.0
        %v889 = vmax.f32 %v881, 0.0
        %v890 = vmax.f32 %v882, 0.0
        %v891 = vmax.f32 %v883, 0.0
        %892 = vst [vmem:[%s417] sm:$0xff] %v884
        %893 = vst [vmem:[%s417 + $0x8] sm:$0xff] %v885
        %894 = vst [vmem:[%s417 + $0x10] sm:$0xff] %v886
        %895 = vst [vmem:[%s417 + $0x18] sm:$0xff] %v887
        %896 = vst [vmem:[%s417 + $0x20] sm:$0xff] %v888
        %897 = vst [vmem:[%s417 + $0x28] sm:$0xff] %v889
        %898 = vst [vmem:[%s417 + $0x30] sm:$0xff] %v890
        %899 = vst [vmem:[%s417 + $0x38] sm:$0xff] %v891
        %s900 = sand.u32 %s210, 1
        %s901 = scalar_lea.sflag [#allocation4], %s900
        %s902 = sand.u32 %s210, 1
        %s903 = smul.addr %s902, 64
        %s904 = scalar_lea.vmem [#allocation16], %s903
        // Predicated region
        $region85: #{tpu_custom_call.1} parent=51 // pred_check
          %p905 = pneg %p220
        $region86: #{tpu_custom_call.1} parent=51 // pred_check_branch
          %907 = sbr.rel (%p905) target = $region88
        $region87: #{tpu_custom_call.1} parent=51 // pred_region
          %s909 = ssub.s32 1024, 1024
          %910 = vsyncadd %s901, %s909
          %s911 = smul.addr %s29, 8
          %s912 = smul.addr %s911, 128
          %s913 = scalar_lea.hbm %s8, %s912
          %s914 = sshll.u32 %s904, 4
          %s915 = int_to_ptr.vmem [resolvable:$true] %s914
          %920 = dma.vmem_to_hbm [thread:$0]  %s915, 1024, %s913, %s901, 256, 256, 16
        $region88: #{tpu_custom_call.1} parent=51 // pred_fallthru
          _
      $region52: #{tpu_custom_call.1} parent=5 // pred_fallthru
        _
      %p921 = scmp.le.s32.totalorder 2, %s24
      // Predicated region
      $region89: #{tpu_custom_call.1} parent=5 // pred_check
        %p922 = pneg %p921
      $region90: #{tpu_custom_call.1} parent=5 // pred_check_branch
        %924 = sbr.rel (%p922) target = $region92
      $region91: #{tpu_custom_call.1} parent=5 // pred_region
        %s925 = ssub.s32 %s24, 2
        // Predicated region
        $region93: #{tpu_custom_call.1} parent=91 // pred_check
          %p926 = pneg %p226
        $region94: #{tpu_custom_call.1} parent=91 // pred_check_branch
          %928 = sbr.rel (%p926) target = $region96
        $region95: #{tpu_custom_call.1} parent=91 // pred_region
          %s929 = sand.u32 %s211, 1
          %s930 = scalar_lea.sflag [#allocation4], %s929
          %s931 = sand.u32 %s211, 1
          %s932 = smul.addr %s931, 64
          %s933 = scalar_lea.vmem [#allocation16], %s932
          %934 = dma.done %s930, 1024
        $region96: #{tpu_custom_call.1} parent=91 // pred_fallthru
          _
      $region92: #{tpu_custom_call.1} parent=5 // pred_fallthru
        _
    $region6: #{tpu_custom_call.1} parent=1 // loop_footer
      %s28 = sadd.s32 1, %s24
    $region7: #{tpu_custom_call.1} parent=1 // loop_footer_branch
      %23 = sbr.rel target = $region3
    $region8: #{tpu_custom_call.1} parent=1 // loop_exit
      _
    %935 = vsyncpa [#allocation3], 1
    %s936 = scalar_lea.sflag [#allocation3], 1
    %937 = vsyncpa %s936, 1
    %938 = vsyncpa [#allocation6], 1
    %939 = vsyncpa [#allocation9], 1
    %940 = vsyncpa [#allocation12], 1
    %941 = vsyncpa [#allocation15], 1
    %942 = vsyncpa [#allocation4], 1
    %s943 = scalar_lea.sflag [#allocation4], 1
    %944 = vsyncpa %s943, 1

// kernel: tpu_custom_call.1
$region0: #{tpu_custom_call.1}
  #allocation0 [shape = 'u32[]', space=smem, size = 0x4, offset = 0x4, fixed_abs, tag = 'smem constant byte address 0x4 - core index']
  #allocation1 [shape = 'u32[144,128]{1,0:T(1,128)}', space=vmem, size = 0x12000, scoped, tag = 'internal scratch']
  %s0 = inlined_call_operand.hbm [shape: f32[2,32,256], index: 0, kind: input, shape index: {}]
  %s1 = inlined_call_operand.hbm [shape: f32[9,256], index: 1, kind: input, shape index: {}]
  %s2 = inlined_call_operand.hbm [shape: f32[8,32], index: 2, kind: input, shape index: {}]
  %s3 = inlined_call_operand.hbm [shape: f32[8,1], index: 3, kind: input, shape index: {}]
  %s4 = inlined_call_operand.hbm [shape: f32[8,72], index: 4, kind: input, shape index: {}]
  %s5 = inlined_call_operand.hbm [shape: f32[8,1], index: 5, kind: input, shape index: {}]
  %s6 = inlined_call_operand.hbm [shape: f32[32,8], index: 6, kind: input, shape index: {}]
  %s7 = inlined_call_operand.hbm [shape: f32[32,1], index: 7, kind: input, shape index: {}]
  %s8 = inlined_call_operand.hbm [shape: f32[2,32,256], index: 8, kind: output, shape index: {}]
  %s9 = sld [smem:[#allocation0]]
  $region97: #{tpu_custom_call.1} parent=0
    _
  %s11 = ssub.s32 1, %s9
  %s12 = scalar_select 0, %s11, %s9
  $region1: #{tpu_custom_call.1} parent=0
    #allocation2 [shape = 'u8[65536]{0}', space=vmem, size = 0x10000, scoped, tag = 'input window, operand 0']
    #allocation3 [shape = 's32[2]{0}', space=sflag, size = 0x8, scoped, tag = 'scoped memory for tpu_custom_call.1']
    #allocation4 [shape = 's32[2]{0}', space=sflag, size = 0x8, scoped, tag = 'scoped memory for tpu_custom_call.1']
    #allocation5 [shape = 'u8[16384]{0}', space=vmem, size = 0x4000, scoped, tag = 'input window, operand 1, single buffered']
    #allocation6 [shape = 's32[1]{0}', space=sflag, size = 0x4, scoped, tag = 'scoped memory for tpu_custom_call.1']
    #allocation7 [shape = 'u8[4096]{0}', space=vmem, size = 0x1000, scoped, tag = 'input window, operand 2, single buffered']
    #allocation8 [shape = 'u8[4096]{0}', space=vmem, size = 0x1000, scoped, tag = 'input window, operand 3, single buffered']
    #allocation9 [shape = 's32[1]{0}', space=sflag, size = 0x4, scoped, tag = 'scoped memory for tpu_custom_call.1']
    #allocation10 [shape = 'u8[4096]{0}', space=vmem, size = 0x1000, scoped, tag = 'input window, operand 4, single buffered']
    #allocation11 [shape = 'u8[4096]{0}', space=vmem, size = 0x1000, scoped, tag = 'input window, operand 5, single buffered']
    #allocation12 [shape = 's32[1]{0}', space=sflag, size = 0x4, scoped, tag = 'scoped memory for tpu_custom_call.1']
    #allocation13 [shape = 'u8[16384]{0}', space=vmem, size = 0x4000, scoped, tag = 'input window, operand 6, single buffered']
    #allocation14 [shape = 'u8[16384]{0}', space=vmem, size = 0x4000, scoped, tag = 'input window, operand 7, single buffered']
    #allocation15 [shape = 's32[1]{0}', space=sflag, size = 0x4, scoped, tag = 'scoped memory for tpu_custom_call.1']
    #allocation16 [shape = 'u8[65536]{0}', space=vmem, size = 0x10000, scoped, tag = 'output window, operand 0']
    %13 = vsyncpa [#allocation3], 0
    %s14 = scalar_lea.sflag [#allocation3], 1
    %15 = vsyncpa %s14, 0
    %16 = vsyncpa [#allocation6], 0
    %17 = vsyncpa [#allocation9], 0
    %18 = vsyncpa [#allocation12], 0
    %19 = vsyncpa [#allocation15], 0
    %20 = vsyncpa [#allocation4], 0
    %s21 = scalar_lea.sflag [#allocation4], 1
    %22 = vsyncpa %s21, 0
    loop: start=0, step=1, limit=4
    $region2: #{tpu_custom_call.1} parent=1 // loop_pre_header
      _
    $region3: #{tpu_custom_call.1} parent=1 // loop_header
      %s24 = sphi 0, %s28
      %p25 = scmp.ge.s32.totalorder %s24, 4
      %s34 = sphi 0, %s36
      %s37 = sphi 0, %s34
      %s38 = sphi 0, %s37
      %s54 = sphi 0, %s38
      %s58 = sphi 0, %s58
      %s60 = sphi 0, %s58
      %s61 = sphi 0, %s60
      %s75 = sphi 0, %s61
      %s79 = sphi 0, %s79
      %s81 = sphi 0, %s79
      %s82 = sphi 0, %s81
      %s96 = sphi 0, %s82
      %s100 = sphi 0, %s100
      %s102 = sphi 0, %s100
      %s103 = sphi 0, %s102
      %s117 = sphi 0, %s103
      %s121 = sphi 0, %s121
      %s123 = sphi 0, %s121
      %s124 = sphi 0, %s123
      %s138 = sphi 0, %s124
      %s142 = sphi 0, %s142
      %s144 = sphi 0, %s142
      %s145 = sphi 0, %s144
      %s159 = sphi 0, %s145
      %s163 = sphi 0, %s163
      %s165 = sphi 0, %s163
      %s166 = sphi 0, %s165
      %s180 = sphi 0, %s166
      %s184 = sphi 0, %s184
      %s186 = sphi 0, %s184
      %s187 = sphi 0, %s186
      %s201 = sphi 0, %s187
      %s207 = sphi 0, %s209
      %s210 = sphi 0, %s207
      %s211 = sphi 0, %s210
      %s227 = sphi 0, %s211
    $region4: #{tpu_custom_call.1} parent=1 // loop_header_branch
      %27 = sbr.rel (%p25) target = $region8
    $region5: #{tpu_custom_call.1} parent=1 // loop_body
      %s29 = ssub.s32 %s24, 1
      %s30 = ssub.s32 %s24, 2
      %s31 = sadd.s32 %s24, 1
      %s32 = ssub.s32 %s24, %s31
      %p33 = scmp.eq.s32.totalorder %s32, 0
      %s35 = sadd.s32 %s34, 1
      %s36 = scalar_select %p33, %s34, %s35
      %p39 = pneg %p33
      %p40 = scmp.eq.s32.totalorder %s24, 1
      %p41 = por %p39, %p40
      %p42 = scmp.ne.s32.totalorder %s34, %s37
      %p43 = scmp.eq.s32.totalorder %s24, 0
      %p44 = por %p42, %p43
      %p45 = scmp.ne.s32.totalorder %s34, %s37
      %p46 = scmp.eq.s32.totalorder %s29, 1
      %p47 = por %p45, %p46
      %p48 = scmp.ne.s32.totalorder %s37, %s38
      %p49 = scmp.eq.s32.totalorder %s29, 0
      %p50 = por %p48, %p49
      %p51 = scmp.ne.s32.totalorder %s37, %s38
      %p52 = scmp.eq.s32.totalorder %s30, 1
      %p53 = por %p51, %p52
      %p55 = scmp.ne.s32.totalorder %s38, %s54
      %p56 = scmp.eq.s32.totalorder %s30, 0
      %p57 = por %p55, %p56
      %s59 = sadd.s32 %s58, 1
      %p62 = scmp.eq.s32.totalorder %s24, 1
      %p63 = scmp.ne.s32.totalorder %s58, %s60
      %p64 = scmp.eq.s32.totalorder %s24, 0
      %p65 = por %p63, %p64
      %p66 = scmp.ne.s32.totalorder %s58, %s60
      %p67 = scmp.eq.s32.totalorder %s29, 1
      %p68 = por %p66, %p67
      %p69 = scmp.ne.s32.totalorder %s60, %s61
      %p70 = scmp.eq.s32.totalorder %s29, 0
      %p71 = por %p69, %p70
      %p72 = scmp.ne.s32.totalorder %s60, %s61
      %p73 = scmp.eq.s32.totalorder %s30, 1
      %p74 = por %p72, %p73
      %p76 = scmp.ne.s32.totalorder %s61, %s75
      %p77 = scmp.eq.s32.totalorder %s30, 0
      %p78 = por %p76, %p77
      %s80 = sadd.s32 %s79, 1
      %p83 = scmp.eq.s32.totalorder %s24, 1
      %p84 = scmp.ne.s32.totalorder %s79, %s81
      %p85 = scmp.eq.s32.totalorder %s24, 0
      %p86 = por %p84, %p85
      %p87 = scmp.ne.s32.totalorder %s79, %s81
      %p88 = scmp.eq.s32.totalorder %s29, 1
      %p89 = por %p87, %p88
      %p90 = scmp.ne.s32.totalorder %s81, %s82
      %p91 = scmp.eq.s32.totalorder %s29, 0
      %p92 = por %p90, %p91
      %p93 = scmp.ne.s32.totalorder %s81, %s82
      %p94 = scmp.eq.s32.totalorder %s30, 1
      %p95 = por %p93, %p94
      %p97 = scmp.ne.s32.totalorder %s82, %s96
      %p98 = scmp.eq.s32.totalorder %s30, 0
      %p99 = por %p97, %p98
      %s101 = sadd.s32 %s100, 1
      %p104 = scmp.eq.s32.totalorder %s24, 1
      %p105 = scmp.ne.s32.totalorder %s100, %s102
      %p106 = scmp.eq.s32.totalorder %s24, 0
      %p107 = por %p105, %p106
      %p108 = scmp.ne.s32.totalorder %s100, %s102
      %p109 = scmp.eq.s32.totalorder %s29, 1
      %p110 = por %p108, %p109
      %p111 = scmp.ne.s32.totalorder %s102, %s103
      %p112 = scmp.eq.s32.totalorder %s29, 0
      %p113 = por %p111, %p112
      %p114 = scmp.ne.s32.totalorder %s102, %s103
      %p115 = scmp.eq.s32.totalorder %s30, 1
      %p116 = por %p114, %p115
      %p118 = scmp.ne.s32.totalorder %s103, %s117
      %p119 = scmp.eq.s32.totalorder %s30, 0
      %p120 = por %p118, %p119
      %s122 = sadd.s32 %s121, 1
      %p125 = scmp.eq.s32.totalorder %s24, 1
      %p126 = scmp.ne.s32.totalorder %s121, %s123
      %p127 = scmp.eq.s32.totalorder %s24, 0
      %p128 = por %p126, %p127
      %p129 = scmp.ne.s32.totalorder %s121, %s123
      %p130 = scmp.eq.s32.totalorder %s29, 1
      %p131 = por %p129, %p130
      %p132 = scmp.ne.s32.totalorder %s123, %s124
      %p133 = scmp.eq.s32.totalorder %s29, 0
      %p134 = por %p132, %p133
      %p135 = scmp.ne.s32.totalorder %s123, %s124
      %p136 = scmp.eq.s32.totalorder %s30, 1
      %p137 = por %p135, %p136
      %p139 = scmp.ne.s32.totalorder %s124, %s138
      %p140 = scmp.eq.s32.totalorder %s30, 0
      %p141 = por %p139, %p140
      %s143 = sadd.s32 %s142, 1
      %p146 = scmp.eq.s32.totalorder %s24, 1
      %p147 = scmp.ne.s32.totalorder %s142, %s144
      %p148 = scmp.eq.s32.totalorder %s24, 0
      %p149 = por %p147, %p148
      %p150 = scmp.ne.s32.totalorder %s142, %s144
      %p151 = scmp.eq.s32.totalorder %s29, 1
      %p152 = por %p150, %p151
      %p153 = scmp.ne.s32.totalorder %s144, %s145
      %p154 = scmp.eq.s32.totalorder %s29, 0
      %p155 = por %p153, %p154
      %p156 = scmp.ne.s32.totalorder %s144, %s145
      %p157 = scmp.eq.s32.totalorder %s30, 1
      %p158 = por %p156, %p157
      %p160 = scmp.ne.s32.totalorder %s145, %s159
      %p161 = scmp.eq.s32.totalorder %s30, 0
      %p162 = por %p160, %p161
      %s164 = sadd.s32 %s163, 1
      %p167 = scmp.eq.s32.totalorder %s24, 1
      %p168 = scmp.ne.s32.totalorder %s163, %s165
      %p169 = scmp.eq.s32.totalorder %s24, 0
      %p170 = por %p168, %p169
      %p171 = scmp.ne.s32.totalorder %s163, %s165
      %p172 = scmp.eq.s32.totalorder %s29, 1
      %p173 = por %p171, %p172
      %p174 = scmp.ne.s32.totalorder %s165, %s166
      %p175 = scmp.eq.s32.totalorder %s29, 0
      %p176 = por %p174, %p175
      %p177 = scmp.ne.s32.totalorder %s165, %s166
      %p178 = scmp.eq.s32.totalorder %s30, 1
      %p179 = por %p177, %p178
      %p181 = scmp.ne.s32.totalorder %s166, %s180
      %p182 = scmp.eq.s32.totalorder %s30, 0
      %p183 = por %p181, %p182
      %s185 = sadd.s32 %s184, 1
      %p188 = scmp.eq.s32.totalorder %s24, 1
      %p189 = scmp.ne.s32.totalorder %s184, %s186
      %p190 = scmp.eq.s32.totalorder %s24, 0
      %p191 = por %p189, %p190
      %p192 = scmp.ne.s32.totalorder %s184, %s186
      %p193 = scmp.eq.s32.totalorder %s29, 1
      %p194 = por %p192, %p193
      %p195 = scmp.ne.s32.totalorder %s186, %s187
      %p196 = scmp.eq.s32.totalorder %s29, 0
      %p197 = por %p195, %p196
      %p198 = scmp.ne.s32.totalorder %s186, %s187
      %p199 = scmp.eq.s32.totalorder %s30, 1
      %p200 = por %p198, %p199
      %p202 = scmp.ne.s32.totalorder %s187, %s201
      %p203 = scmp.eq.s32.totalorder %s30, 0
      %p204 = por %p202, %p203
      %s205 = ssub.s32 %s24, %s31
      %p206 = scmp.eq.s32.totalorder %s205, 0
      %s208 = sadd.s32 %s207, 1
      %s209 = scalar_select %p206, %s207, %s208
      %p212 = pneg %p206
      %p213 = scmp.eq.s32.totalorder %s24, 1
      %p214 = por %p212, %p213
      %p215 = scmp.ne.s32.totalorder %s207, %s210
      %p216 = scmp.eq.s32.totalorder %s24, 0
      %p217 = por %p215, %p216
      %p218 = scmp.ne.s32.totalorder %s207, %s210
      %p219 = scmp.eq.s32.totalorder %s29, 1
      %p220 = por %p218, %p219
      %p221 = scmp.ne.s32.totalorder %s210, %s211
      %p222 = scmp.eq.s32.totalorder %s29, 0
      %p223 = por %p221, %p222
      %p224 = scmp.ne.s32.totalorder %s210, %s211
      %p225 = scmp.eq.s32.totalorder %s30, 1
      %p226 = por %p224, %p225
      %p228 = scmp.ne.s32.totalorder %s211, %s227
      %p229 = scmp.eq.s32.totalorder %s30, 0
      %p230 = por %p228, %p229
      %p231 = scmp.le.s32.totalorder 1, %s24
      %p232 = scmp.lt.s32.totalorder %s24, 3
      %p233 = pnand %p231, %p232
      %p234 = pneg %p233
      // Predicated region
      $region9: #{tpu_custom_call.1} parent=5 // pred_check
        _
      $region10: #{tpu_custom_call.1} parent=5 // pred_check_branch
        %236 = sbr.rel (%p233) target = $region12
      $region11: #{tpu_custom_call.1} parent=5 // pred_region
        %s237 = ssub.s32 %s24, 1
        // Predicated region
        $region13: #{tpu_custom_call.1} parent=11 // pred_check
          %p238 = pneg %p71
        $region14: #{tpu_custom_call.1} parent=11 // pred_check_branch
          %240 = sbr.rel (%p238) target = $region16
        $region15: #{tpu_custom_call.1} parent=11 // pred_region
          %s242 = ssub.s32 512, 512
          %243 = vsyncadd [#allocation6], %s242
          %s244 = sshll.u32 [#allocation5], 4
          %s245 = int_to_ptr.vmem [resolvable:$true] %s244
          %250 = dma.hbm_to_vmem [thread:$0]  %s1, 512, %s245, [#allocation6], 256, 256, 16
        $region16: #{tpu_custom_call.1} parent=11 // pred_fallthru
          _
        // Predicated region
        $region17: #{tpu_custom_call.1} parent=11 // pred_check
          %p251 = pneg %p92
        $region18: #{tpu_custom_call.1} parent=11 // pred_check_branch
          %253 = sbr.rel (%p251) target = $region20
        $region19: #{tpu_custom_call.1} parent=11 // pred_region
          %s255 = ssub.s32 128, 128
          %256 = vsyncadd [#allocation6], %s255
          %s258 = sshll.u32 [#allocation7], 4
          %s259 = int_to_ptr.vmem [resolvable:$true] %s258
          %261 = dma.hbm_to_vmem [thread:$0]  %s2, 128, %s259, [#allocation6]
        $region20: #{tpu_custom_call.1} parent=11 // pred_fallthru
          _
        // Predicated region
        $region21: #{tpu_custom_call.1} parent=11 // pred_check
          %p262 = pneg %p113
        $region22: #{tpu_custom_call.1} parent=11 // pred_check_branch
          %264 = sbr.rel (%p262) target = $region24
        $region23: #{tpu_custom_call.1} parent=11 // pred_region
          %s266 = ssub.s32 128, 128
          %267 = vsyncadd [#allocation9], %s266
          %s269 = sshll.u32 [#allocation8], 4
          %s270 = int_to_ptr.vmem [resolvable:$true] %s269
          %272 = dma.hbm_to_vmem [thread:$0]  %s3, 128, %s270, [#allocation9]
        $region24: #{tpu_custom_call.1} parent=11 // pred_fallthru
          _
        // Predicated region
        $region25: #{tpu_custom_call.1} parent=11 // pred_check
          %p273 = pneg %p134
        $region26: #{tpu_custom_call.1} parent=11 // pred_check_branch
          %275 = sbr.rel (%p273) target = $region28
        $region27: #{tpu_custom_call.1} parent=11 // pred_region
          %s277 = ssub.s32 128, 128
          %278 = vsyncadd [#allocation9], %s277
          %s280 = sshll.u32 [#allocation10], 4
          %s281 = int_to_ptr.vmem [resolvable:$true] %s280
          %283 = dma.hbm_to_vmem [thread:$0]  %s4, 128, %s281, [#allocation9]
        $region28: #{tpu_custom_call.1} parent=11 // pred_fallthru
          _
        // Predicated region
        $region29: #{tpu_custom_call.1} parent=11 // pred_check
          %p284 = pneg %p155
        $region30: #{tpu_custom_call.1} parent=11 // pred_check_branch
          %286 = sbr.rel (%p284) target = $region32
        $region31: #{tpu_custom_call.1} parent=11 // pred_region
          %s288 = ssub.s32 128, 128
          %289 = vsyncadd [#allocation12], %s288
          %s291 = sshll.u32 [#allocation11], 4
          %s292 = int_to_ptr.vmem [resolvable:$true] %s291
          %294 = dma.hbm_to_vmem [thread:$0]  %s5, 128, %s292, [#allocation12]
        $region32: #{tpu_custom_call.1} parent=11 // pred_fallthru
          _
        // Predicated region
        $region33: #{tpu_custom_call.1} parent=11 // pred_check
          %p295 = pneg %p176
        $region34: #{tpu_custom_call.1} parent=11 // pred_check_branch
          %297 = sbr.rel (%p295) target = $region36
        $region35: #{tpu_custom_call.1} parent=11 // pred_region
          %s299 = ssub.s32 512, 512
          %300 = vsyncadd [#allocation12], %s299
          %s301 = sshll.u32 [#allocation13], 4
          %s302 = int_to_ptr.vmem [resolvable:$true] %s301
          %307 = dma.hbm_to_vmem [thread:$0]  %s6, 512, %s302, [#allocation12], 128, 128, 8
        $region36: #{tpu_custom_call.1} parent=11 // pred_fallthru
          _
        // Predicated region
        $region37: #{tpu_custom_call.1} parent=11 // pred_check
          %p308 = pneg %p197
        $region38: #{tpu_custom_call.1} parent=11 // pred_check_branch
          %310 = sbr.rel (%p308) target = $region40
        $region39: #{tpu_custom_call.1} parent=11 // pred_region
          %s312 = ssub.s32 512, 512
          %313 = vsyncadd [#allocation15], %s312
          %s314 = sshll.u32 [#allocation14], 4
          %s315 = int_to_ptr.vmem [resolvable:$true] %s314
          %320 = dma.hbm_to_vmem [thread:$0]  %s7, 512, %s315, [#allocation15], 128, 128, 8
        $region40: #{tpu_custom_call.1} parent=11 // pred_fallthru
          _
      $region12: #{tpu_custom_call.1} parent=5 // pred_fallthru
        _
      %p321 = scmp.lt.s32.totalorder %s24, 2
      // Predicated region
      $region41: #{tpu_custom_call.1} parent=5 // pred_check
        %p322 = pneg %p321
      $region42: #{tpu_custom_call.1} parent=5 // pred_check_branch
        %324 = sbr.rel (%p322) target = $region44
      $region43: #{tpu_custom_call.1} parent=5 // pred_region
        // Predicated region
        $region45: #{tpu_custom_call.1} parent=43 // pred_check
          %p325 = pneg %p44
        $region46: #{tpu_custom_call.1} parent=43 // pred_check_branch
          %327 = sbr.rel (%p325) target = $region48
        $region47: #{tpu_custom_call.1} parent=43 // pred_region
          %s328 = sand.u32 %s34, 1
          %s329 = scalar_lea.sflag [#allocation3], %s328
          %s330 = sand.u32 %s34, 1
          %s331 = smul.addr %s330, 64
          %s332 = scalar_lea.vmem [#allocation2], %s331
          %s334 = ssub.s32 1024, 1024
          %335 = vsyncadd %s329, %s334
          %s336 = smul.addr %s24, 8
          %s337 = smul.addr %s336, 128
          %s338 = scalar_lea.hbm %s0, %s337
          %s339 = sshll.u32 %s332, 4
          %s340 = int_to_ptr.vmem [resolvable:$true] %s339
          %345 = dma.hbm_to_vmem [thread:$0]  %s338, 1024, %s340, %s329, 256, 256, 16
        $region48: #{tpu_custom_call.1} parent=43 // pred_fallthru
          _
      $region44: #{tpu_custom_call.1} parent=5 // pred_fallthru
        _
      %p346 = scmp.le.s32.totalorder 1, %s24
      %p347 = scmp.lt.s32.totalorder %s24, 3
      %p348 = pnand %p346, %p347
      %p349 = pneg %p348
      // Predicated region
      $region49: #{tpu_custom_call.1} parent=5 // pred_check
        _
      $region50: #{tpu_custom_call.1} parent=5 // pred_check_branch
        %351 = sbr.rel (%p348) target = $region52
      $region51: #{tpu_custom_call.1} parent=5 // pred_region
        %s352 = ssub.s32 %s24, 1
        %s353 = sand.u32 %s37, 1
        %s354 = scalar_lea.sflag [#allocation3], %s353
        %s355 = sand.u32 %s37, 1
        %s356 = smul.addr %s355, 64
        %s357 = scalar_lea.vmem [#allocation2], %s356
        // Predicated region
        $region53: #{tpu_custom_call.1} parent=51 // pred_check
          %p358 = pneg %p50
        $region54: #{tpu_custom_call.1} parent=51 // pred_check_branch
          %360 = sbr.rel (%p358) target = $region56
        $region55: #{tpu_custom_call.1} parent=51 // pred_region
          %361 = dma.done %s354, 1024
        $region56: #{tpu_custom_call.1} parent=51 // pred_fallthru
          _
        // Predicated region
        $region57: #{tpu_custom_call.1} parent=51 // pred_check
          %p362 = pneg %p71
        $region58: #{tpu_custom_call.1} parent=51 // pred_check_branch
          %364 = sbr.rel (%p362) target = $region60
        $region59: #{tpu_custom_call.1} parent=51 // pred_region
          %365 = dma.done [#allocation6], 512
        $region60: #{tpu_custom_call.1} parent=51 // pred_fallthru
          _
        // Predicated region
        $region61: #{tpu_custom_call.1} parent=51 // pred_check
          %p366 = pneg %p92
        $region62: #{tpu_custom_call.1} parent=51 // pred_check_branch
          %368 = sbr.rel (%p366) target = $region64
        $region63: #{tpu_custom_call.1} parent=51 // pred_region
          %369 = dma.done [#allocation6], 128
        $region64: #{tpu_custom_call.1} parent=51 // pred_fallthru
          _
        // Predicated region
        $region65: #{tpu_custom_call.1} parent=51 // pred_check
          %p370 = pneg %p113
        $region66: #{tpu_custom_call.1} parent=51 // pred_check_branch
          %372 = sbr.rel (%p370) target = $region68
        $region67: #{tpu_custom_call.1} parent=51 // pred_region
          %373 = dma.done [#allocation9], 128
        $region68: #{tpu_custom_call.1} parent=51 // pred_fallthru
          _
        // Predicated region
        $region69: #{tpu_custom_call.1} parent=51 // pred_check
          %p374 = pneg %p134
        $region70: #{tpu_custom_call.1} parent=51 // pred_check_branch
          %376 = sbr.rel (%p374) target = $region72
        $region71: #{tpu_custom_call.1} parent=51 // pred_region
          %377 = dma.done [#allocation9], 128
        $region72: #{tpu_custom_call.1} parent=51 // pred_fallthru
          _
        // Predicated region
        $region73: #{tpu_custom_call.1} parent=51 // pred_check
          %p378 = pneg %p155
        $region74: #{tpu_custom_call.1} parent=51 // pred_check_branch
          %380 = sbr.rel (%p378) target = $region76
        $region75: #{tpu_custom_call.1} parent=51 // pred_region
          %381 = dma.done [#allocation12], 128
        $region76: #{tpu_custom_call.1} parent=51 // pred_fallthru
          _
        // Predicated region
        $region77: #{tpu_custom_call.1} parent=51 // pred_check
          %p382 = pneg %p176
        $region78: #{tpu_custom_call.1} parent=51 // pred_check_branch
          %384 = sbr.rel (%p382) target = $region80
        $region79: #{tpu_custom_call.1} parent=51 // pred_region
          %385 = dma.done [#allocation12], 512
        $region80: #{tpu_custom_call.1} parent=51 // pred_fallthru
          _
        // Predicated region
        $region81: #{tpu_custom_call.1} parent=51 // pred_check
          %p386 = pneg %p197
        $region82: #{tpu_custom_call.1} parent=51 // pred_check_branch
          %388 = sbr.rel (%p386) target = $region84
        $region83: #{tpu_custom_call.1} parent=51 // pred_region
          %389 = dma.done [#allocation15], 512
        $region84: #{tpu_custom_call.1} parent=51 // pred_fallthru
          _
        %s390 = sand.u32 %s37, 1
        %s391 = scalar_lea.sflag [#allocation3], %s390
        %s392 = sand.u32 %s37, 1
        %s393 = smul.addr %s392, 64
        %s394 = scalar_lea.vmem [#allocation2], %s393
        %p395 = pneg %p50
        %p396 = pneg %p47
        %p397 = pneg %p71
        %p398 = pneg %p68
        %p399 = pneg %p92
        %p400 = pneg %p89
        %p401 = pneg %p113
        %p402 = pneg %p110
        %p403 = pneg %p134
        %p404 = pneg %p131
        %p405 = pneg %p155
        %p406 = pneg %p152
        %p407 = pneg %p176
        %p408 = pneg %p173
        %p409 = pneg %p197
        %p410 = pneg %p194
        %p411 = pneg %p223
        %p412 = pneg %p220
        %s413 = sand.u32 %s210, 1
        %s414 = scalar_lea.sflag [#allocation4], %s413
        %s415 = sand.u32 %s210, 1
        %s416 = smul.addr %s415, 64
        %s417 = scalar_lea.vmem [#allocation16], %s416
        %v418 = vld [vmem:[#allocation7] sm:$0xff]
        %v419 = vld [vmem:[#allocation13] sm:$0xff]
        %v420 = vld [vmem:[#allocation13 + $0x8] sm:$0xff]
        %v421 = vld [vmem:[#allocation13 + $0x10] sm:$0xff]
        %v422 = vld [vmem:[#allocation13 + $0x18] sm:$0xff]
        %v423 = vld [vmem:[#allocation8] sm:$0xff]
        %v424 = vld [vmem:[#allocation11] sm:$0xff]
        %v425 = vld [vmem:[#allocation14] sm:$0xff]
        %v426 = vld [vmem:[#allocation14 + $0x8] sm:$0xff]
        %v427 = vld [vmem:[#allocation14 + $0x10] sm:$0xff]
        %v428 = vld [vmem:[#allocation14 + $0x18] sm:$0xff]
        %v429 = vld [vmem:[#allocation5] sm:$0xff]
        %v430 = vld [vmem:[#allocation5 + $0x8] sm:$0xff]
        %v431 = vld [vmem:[#allocation5 + $0x10] sm:$0x1]
        %v432 = vld [vmem:[#allocation5 + $0x18] sm:$0x1]
        %v433 = vld [vmem:[#allocation10] sm:$0xff]
        %v434 = vld [vmem:[%s357] sm:$0xff]
        %v435 = vld [vmem:[%s357 + $0x8] sm:$0xff]
        %v436 = vld [vmem:[%s357 + $0x10] sm:$0xff]
        %v437 = vld [vmem:[%s357 + $0x18] sm:$0xff]
        %v438 = vld [vmem:[%s357 + $0x20] sm:$0xff]
        %v439 = vld [vmem:[%s357 + $0x28] sm:$0xff]
        %v440 = vld [vmem:[%s357 + $0x30] sm:$0xff]
        %v441 = vld [vmem:[%s357 + $0x38] sm:$0xff]
        %443 = vset.pattern.permute.xlu0 0
        %444 = vperm.xlu0 %443, %v423
        %v445 = vpop.permute.xlu0 %444
        %vm447 = vcmask 261120
        %v449 = vsel %vm447, %v418, 0
        %451 = vmatprep.subr.mxu0 %v435
        %452 = vmatpush1.msra.mxu0 %v434
        %453 = vmatprep.subr.mxu0 %v437
        %454 = vmatpush1.msra.mxu0 %v436
        %455 = vmatprep.subr.mxu0 %v439
        %456 = vmatpush1.msra.mxu0 %v438
        %457 = vmatprep.subr.mxu0 %v441
        %458 = vmatpush1.msra.mxu0 %v440
        %459 = vmatprep.subr.mxu0 0.0
        %460 = vmatpush1.msra.mxu0 0.0
        %461 = vmatprep.subr.mxu0 0.0
        %462 = vmatpush1.msra.mxu0 0.0
        %463 = vmatprep.subr.mxu0 0.0
        %464 = vmatpush1.msra.mxu0 0.0
        %465 = vmatprep.subr.mxu0 0.0
        %466 = vmatpush1.msra.mxu0 0.0
        %467 = vmatprep.subr.mxu0 0.0
        %468 = vmatpush1.msra.mxu0 0.0
        %469 = vmatprep.subr.mxu0 0.0
        %470 = vmatpush1.msra.mxu0 0.0
        %471 = vmatprep.subr.mxu0 0.0
        %472 = vmatpush1.msra.mxu0 0.0
        %473 = vmatprep.subr.mxu0 0.0
        %474 = vmatpush1.msra.mxu0 0.0
        %475 = vmatprep.subr.mxu0 0.0
        %476 = vmatpush1.msra.mxu0 0.0
        %477 = vmatprep.subr.mxu0 0.0
        %478 = vmatpush1.msra.mxu0 0.0
        %479 = vmatprep.subr.mxu0 0.0
        %480 = vmatpush1.msra.mxu0 0.0
        %481 = vmatprep.subr.mxu0 0.0
        %482 = vmatpush1.msra.mxu0 0.0
        %483 = vmatprep.subr.mxu0 0.0
        %484 = vmatpush1.msra.mxu0 0.0
        %485 = vmatprep.subr.mxu0 0.0
        %486 = vmatpush1.msra.mxu0 0.0
        %487 = vmatprep.subr.mxu0 0.0
        %488 = vmatpush1.msra.mxu0 0.0
        %489 = vmatprep.subr.mxu0 0.0
        %490 = vmatpush1.msra.mxu0 0.0
        %491 = vmatprep.subr.mxu0 0.0
        %492 = vmatpush1.msra.mxu0 0.0
        %493 = vmatprep.subr.mxu0 0.0
        %494 = vmatpush1.msra.mxu0 0.0
        %495 = vmatprep.subr.mxu0 0.0
        %496 = vmatpush1.msra.mxu0 0.0
        %497 = vmatprep.subr.mxu0 0.0
        %498 = vmatpush1.msra.mxu0 0.0
        %499 = vmatprep.subr.mxu0 0.0
        %500 = vmatpush1.msra.mxu0 0.0
        %501 = vmatprep.subr.mxu0 0.0
        %502 = vmatpush1.msra.mxu0 0.0
        %503 = vmatprep.subr.mxu0 0.0
        %504 = vmatpush1.msra.mxu0 0.0
        %505 = vmatprep.subr.mxu0 0.0
        %506 = vmatpush1.msra.mxu0 0.0
        %507 = vmatprep.subr.mxu0 0.0
        %508 = vmatpush1.msra.mxu0 0.0
        %509 = vmatprep.subr.mxu0 0.0
        %510 = vmatpush1.msra.mxu0 0.0
        %511 = vmatprep.subr.mxu0 0.0
        %512 = vmatpush1.msra.mxu0 0.0
        %513 = vmatprep.subr.mxu0 0.0
        %514 = vmatpush1.msra.mxu0 0.0
        %515 = vmatprep.mubr.f32.mxu0 0.0
        %516 = vmatmul.mubr.f32.gmra.mrb[0].mxu0 %v449
        %v517 = vpop.f32.mrb[0].mxu0
        %v518 = vadd.f32 %v445, %v517
        %v519 = vpop.f32.mrb[0].mxu0
        %v520 = vadd.f32 %v445, %v519
        %521 = vdwg.mxu0
        %v522 = vmax.f32 %v518, 0.0
        %v523 = vmax.f32 %v520, 0.0
        %524 = vrot.lane.b32.xlu0 %v522, 17
        %v525 = vpop.permute.xlu0 %524
        %526 = vrot.lane.b32.xlu0 %v523, 17
        %v527 = vpop.permute.xlu0 %526
        %v528 = vlaneseq
        %v529 = vand.u32 %v528, 127
        %vm530 = vcmp.lt.s32.totalorder %v529, 17
        %v531 = vsel %vm530, %v525, %v527
        %v532 = vsel %vm530, %v527, %v525
        %v533 = vlaneseq
        %v534 = vshrl.u32 %v533, 7
        %v535 = vsub.s32 0, %v534
        %v536 = vrot.slane %v429, %v535
        %v537 = vlaneseq
        %v538 = vshrl.u32 %v537, 7
        %v539 = vsub.s32 0, %v538
        %v540 = vrot.slane %v430, %v539
        %v541 = vmul.f32 %v532, %v536
        %v542 = vmul.f32 %v531, %v540
        %543 = vrot.lane.b32.xlu0 %v522, 16
        %v544 = vpop.permute.xlu0 %543
        %545 = vrot.lane.b32.xlu0 %v523, 16
        %v546 = vpop.permute.xlu0 %545
        %vm547 = vcmp.lt.s32.totalorder %v529, 16
        %v548 = vsel %vm547, %v544, %v546
        %v549 = vsel %vm547, %v546, %v544
        %v550 = vlaneseq
        %v551 = vshrl.u32 %v550, 7
        %v552 = vsub.s32 1, %v551
        %v553 = vrot.slane %v429, %v552
        %v554 = vlaneseq
        %v555 = vshrl.u32 %v554, 7
        %v556 = vsub.s32 1, %v555
        %v557 = vrot.slane %v430, %v556
        %v558 = vmul.f32 %v549, %v553
        %v559 = vmul.f32 %v548, %v557
        %560 = vrot.lane.b32.xlu0 %v522, 15
        %v561 = vpop.permute.xlu0 %560
        %562 = vrot.lane.b32.xlu0 %v523, 15
        %v563 = vpop.permute.xlu0 %562
        %vm564 = vcmp.lt.s32.totalorder %v529, 15
        %v565 = vsel %vm564, %v561, %v563
        %v566 = vsel %vm564, %v563, %v561
        %v567 = vlaneseq
        %v568 = vshrl.u32 %v567, 7
        %v569 = vsub.s32 2, %v568
        %v570 = vrot.slane %v429, %v569
        %v571 = vlaneseq
        %v572 = vshrl.u32 %v571, 7
        %v573 = vsub.s32 2, %v572
        %v574 = vrot.slane %v430, %v573
        %v575 = vmul.f32 %v566, %v570
        %v576 = vmul.f32 %v565, %v574
        %577 = vrot.lane.b32.xlu0 %v522, 1
        %v578 = vpop.permute.xlu0 %577
        %579 = vrot.lane.b32.xlu0 %v523, 1
        %v580 = vpop.permute.xlu0 %579
        %vm581 = vcmp.lt.s32.totalorder %v529, 1
        %v582 = vsel %vm581, %v578, %v580
        %v583 = vsel %vm581, %v580, %v578
        %v584 = vlaneseq
        %v585 = vshrl.u32 %v584, 7
        %v586 = vsub.s32 3, %v585
        %v587 = vrot.slane %v429, %v586
        %v588 = vlaneseq
        %v589 = vshrl.u32 %v588, 7
        %v590 = vsub.s32 3, %v589
        %v591 = vrot.slane %v430, %v590
        %v592 = vmul.f32 %v583, %v587
        %v593 = vmul.f32 %v582, %v591
        %v594 = vlaneseq
        %v595 = vshrl.u32 %v594, 7
        %v596 = vsub.s32 4, %v595
        %v597 = vrot.slane %v429, %v596
        %v598 = vlaneseq
        %v599 = vshrl.u32 %v598, 7
        %v600 = vsub.s32 4, %v599
        %v601 = vrot.slane %v430, %v600
        %v602 = vmul.f32 %v522, %v597
        %v603 = vmul.f32 %v523, %v601
        %604 = vrot.lane.b32.xlu0 %v522, 127
        %v605 = vpop.permute.xlu0 %604
        %606 = vrot.lane.b32.xlu0 %v523, 127
        %v607 = vpop.permute.xlu0 %606
        %vm608 = vcmp.lt.s32.totalorder %v529, 127
        %v609 = vsel %vm608, %v605, %v607
        %v610 = vsel %vm608, %v607, %v605
        %v611 = vlaneseq
        %v612 = vshrl.u32 %v611, 7
        %v613 = vsub.s32 5, %v612
        %v614 = vrot.slane %v429, %v613
        %v615 = vlaneseq
        %v616 = vshrl.u32 %v615, 7
        %v617 = vsub.s32 5, %v616
        %v618 = vrot.slane %v430, %v617
        %v619 = vmul.f32 %v609, %v614
        %v620 = vmul.f32 %v610, %v618
        %621 = vrot.lane.b32.xlu0 %v522, 113
        %v622 = vpop.permute.xlu0 %621
        %623 = vrot.lane.b32.xlu0 %v523, 113
        %v624 = vpop.permute.xlu0 %623
        %vm625 = vcmp.lt.s32.totalorder %v529, 113
        %v626 = vsel %vm625, %v622, %v624
        %v627 = vsel %vm625, %v624, %v622
        %v628 = vlaneseq
        %v629 = vshrl.u32 %v628, 7
        %v630 = vsub.s32 6, %v629
        %v631 = vrot.slane %v429, %v630
        %v632 = vlaneseq
        %v633 = vshrl.u32 %v632, 7
        %v634 = vsub.s32 6, %v633
        %v635 = vrot.slane %v430, %v634
        %v636 = vmul.f32 %v626, %v631
        %v637 = vmul.f32 %v627, %v635
        %638 = vrot.lane.b32.xlu0 %v522, 112
        %v639 = vpop.permute.xlu0 %638
        %640 = vrot.lane.b32.xlu0 %v523, 112
        %v641 = vpop.permute.xlu0 %640
        %vm642 = vcmp.lt.s32.totalorder %v529, 112
        %v643 = vsel %vm642, %v639, %v641
        %v644 = vsel %vm642, %v641, %v639
        %v645 = vlaneseq
        %v646 = vshrl.u32 %v645, 7
        %v647 = vsub.s32 7, %v646
        %v648 = vrot.slane %v429, %v647
        %v649 = vlaneseq
        %v650 = vshrl.u32 %v649, 7
        %v651 = vsub.s32 7, %v650
        %v652 = vrot.slane %v430, %v651
        %v653 = vmul.f32 %v643, %v648
        %v654 = vmul.f32 %v644, %v652
        %655 = vrot.lane.b32.xlu0 %v522, 111
        %v656 = vpop.permute.xlu0 %655
        %657 = vrot.lane.b32.xlu0 %v523, 111
        %v658 = vpop.permute.xlu0 %657
        %vm659 = vcmp.lt.s32.totalorder %v529, 111
        %v660 = vsel %vm659, %v656, %v658
        %v661 = vsel %vm659, %v658, %v656
        %v662 = vlaneseq
        %v663 = vshrl.u32 %v662, 7
        %v664 = vsub.s32 0, %v663
        %v665 = vrot.slane %v431, %v664
        %v666 = vlaneseq
        %v667 = vshrl.u32 %v666, 7
        %v668 = vsub.s32 0, %v667
        %v669 = vrot.slane %v432, %v668
        %v670 = vmul.f32 %v660, %v665
        %v671 = vmul.f32 %v661, %v669
        %673 = vset.pattern.permute.xlu0 0
        %674 = vperm.xlu0 %673, %v424
        %v675 = vpop.permute.xlu0 %674
        %vm677 = vcmask 588800
        %v679 = vsel %vm677, %v433, 0
        %681 = vmatprep.subr.mxu0 %v542
        %682 = vmatpush1.msra.mxu0 %v541
        %683 = vmatprep.subr.mxu0 %v559
        %684 = vmatpush1.msra.mxu0 %v558
        %685 = vmatprep.subr.mxu0 %v576
        %686 = vmatpush1.msra.mxu0 %v575
        %687 = vmatprep.subr.mxu0 %v593
        %688 = vmatpush1.msra.mxu0 %v592
        %689 = vmatprep.subr.mxu0 %v603
        %690 = vmatpush1.msra.mxu0 %v602
        %691 = vmatprep.subr.mxu0 %v620
        %692 = vmatpush1.msra.mxu0 %v619
        %693 = vmatprep.subr.mxu0 %v637
        %694 = vmatpush1.msra.mxu0 %v636
        %695 = vmatprep.subr.mxu0 %v654
        %696 = vmatpush1.msra.mxu0 %v653
        %697 = vmatprep.subr.mxu0 %v671
        %698 = vmatpush1.msra.mxu0 %v670
        %699 = vmatprep.subr.mxu0 0.0
        %700 = vmatpush1.msra.mxu0 0.0
        %701 = vmatprep.subr.mxu0 0.0
        %702 = vmatpush1.msra.mxu0 0.0
        %703 = vmatprep.subr.mxu0 0.0
        %704 = vmatpush1.msra.mxu0 0.0
        %705 = vmatprep.subr.mxu0 0.0
        %706 = vmatpush1.msra.mxu0 0.0
        %707 = vmatprep.subr.mxu0 0.0
        %708 = vmatpush1.msra.mxu0 0.0
        %709 = vmatprep.subr.mxu0 0.0
        %710 = vmatpush1.msra.mxu0 0.0
        %711 = vmatprep.subr.mxu0 0.0
        %712 = vmatpush1.msra.mxu0 0.0
        %713 = vmatprep.subr.mxu0 0.0
        %714 = vmatpush1.msra.mxu0 0.0
        %715 = vmatprep.subr.mxu0 0.0
        %716 = vmatpush1.msra.mxu0 0.0
        %717 = vmatprep.subr.mxu0 0.0
        %718 = vmatpush1.msra.mxu0 0.0
        %719 = vmatprep.subr.mxu0 0.0
        %720 = vmatpush1.msra.mxu0 0.0
        %721 = vmatprep.subr.mxu0 0.0
        %722 = vmatpush1.msra.mxu0 0.0
        %723 = vmatprep.subr.mxu0 0.0
        %724 = vmatpush1.msra.mxu0 0.0
        %725 = vmatprep.subr.mxu0 0.0
        %726 = vmatpush1.msra.mxu0 0.0
        %727 = vmatprep.subr.mxu0 0.0
        %728 = vmatpush1.msra.mxu0 0.0
        %729 = vmatprep.subr.mxu0 0.0
        %730 = vmatpush1.msra.mxu0 0.0
        %731 = vmatprep.subr.mxu0 0.0
        %732 = vmatpush1.msra.mxu0 0.0
        %733 = vmatprep.subr.mxu0 0.0
        %734 = vmatpush1.msra.mxu0 0.0
        %735 = vmatprep.subr.mxu0 0.0
        %736 = vmatpush1.msra.mxu0 0.0
        %737 = vmatprep.subr.mxu0 0.0
        %738 = vmatpush1.msra.mxu0 0.0
        %739 = vmatprep.subr.mxu0 0.0
        %740 = vmatpush1.msra.mxu0 0.0
        %741 = vmatprep.subr.mxu0 0.0
        %742 = vmatpush1.msra.mxu0 0.0
        %743 = vmatprep.subr.mxu0 0.0
        %744 = vmatpush1.msra.mxu0 0.0
        %745 = vmatprep.mubr.f32.mxu0 0.0
        %746 = vmatmul.mubr.f32.gmra.mrb[0].mxu0 %v679
        %v747 = vpop.f32.mrb[0].mxu0
        %v748 = vadd.f32 %v675, %v747
        %v749 = vpop.f32.mrb[0].mxu0
        %v750 = vadd.f32 %v675, %v749
        %751 = vdwg.mxu0
        %v752 = vmax.f32 %v748, 0.0
        %v753 = vmax.f32 %v750, 0.0
        %755 = vset.pattern.permute.xlu0 0
        %756 = vperm.xlu0 %755, %v425
        %v757 = vpop.permute.xlu0 %756
        %760 = vset.pattern.permute.xlu0 0
        %761 = vperm.xlu0 %760, %v426
        %v762 = vpop.permute.xlu0 %761
        %765 = vset.pattern.permute.xlu0 0
        %766 = vperm.xlu0 %765, %v427
        %v767 = vpop.permute.xlu0 %766
        %770 = vset.pattern.permute.xlu0 0
        %771 = vperm.xlu0 %770, %v428
        %v772 = vpop.permute.xlu0 %771
        %vm774 = vcmask 64512
        %v776 = vsel %vm774, %v419, 0
        %v779 = vsel %vm774, %v420, 0
        %v782 = vsel %vm774, %v421, 0
        %v785 = vsel %vm774, %v422, 0
        %787 = vmatprep.subr.mxu0 %v753
        %788 = vmatpush1.msra.mxu0 %v752
        %789 = vmatprep.subr.mxu0 0.0
        %790 = vmatpush1.msra.mxu0 0.0
        %791 = vmatprep.subr.mxu0 0.0
        %792 = vmatpush1.msra.mxu0 0.0
        %793 = vmatprep.subr.mxu0 0.0
        %794 = vmatpush1.msra.mxu0 0.0
        %795 = vmatprep.subr.mxu0 0.0
        %796 = vmatpush1.msra.mxu0 0.0
        %797 = vmatprep.subr.mxu0 0.0
        %798 = vmatpush1.msra.mxu0 0.0
        %799 = vmatprep.subr.mxu0 0.0
        %800 = vmatpush1.msra.mxu0 0.0
        %801 = vmatprep.subr.mxu0 0.0
        %802 = vmatpush1.msra.mxu0 0.0
        %803 = vmatprep.subr.mxu0 0.0
        %804 = vmatpush1.msra.mxu0 0.0
        %805 = vmatprep.subr.mxu0 0.0
        %806 = vmatpush1.msra.mxu0 0.0
        %807 = vmatprep.subr.mxu0 0.0
        %808 = vmatpush1.msra.mxu0 0.0
        %809 = vmatprep.subr.mxu0 0.0
        %810 = vmatpush1.msra.mxu0 0.0
        %811 = vmatprep.subr.mxu0 0.0
        %812 = vmatpush1.msra.mxu0 0.0
        %813 = vmatprep.subr.mxu0 0.0
        %814 = vmatpush1.msra.mxu0 0.0
        %815 = vmatprep.subr.mxu0 0.0
        %816 = vmatpush1.msra.mxu0 0.0
        %817 = vmatprep.subr.mxu0 0.0
        %818 = vmatpush1.msra.mxu0 0.0
        %819 = vmatprep.subr.mxu0 0.0
        %820 = vmatpush1.msra.mxu0 0.0
        %821 = vmatprep.subr.mxu0 0.0
        %822 = vmatpush1.msra.mxu0 0.0
        %823 = vmatprep.subr.mxu0 0.0
        %824 = vmatpush1.msra.mxu0 0.0
        %825 = vmatprep.subr.mxu0 0.0
        %826 = vmatpush1.msra.mxu0 0.0
        %827 = vmatprep.subr.mxu0 0.0
        %828 = vmatpush1.msra.mxu0 0.0
        %829 = vmatprep.subr.mxu0 0.0
        %830 = vmatpush1.msra.mxu0 0.0
        %831 = vmatprep.subr.mxu0 0.0
        %832 = vmatpush1.msra.mxu0 0.0
        %833 = vmatprep.subr.mxu0 0.0
        %834 = vmatpush1.msra.mxu0 0.0
        %835 = vmatprep.subr.mxu0 0.0
        %836 = vmatpush1.msra.mxu0 0.0
        %837 = vmatprep.subr.mxu0 0.0
        %838 = vmatpush1.msra.mxu0 0.0
        %839 = vmatprep.subr.mxu0 0.0
        %840 = vmatpush1.msra.mxu0 0.0
        %841 = vmatprep.subr.mxu0 0.0
        %842 = vmatpush1.msra.mxu0 0.0
        %843 = vmatprep.subr.mxu0 0.0
        %844 = vmatpush1.msra.mxu0 0.0
        %845 = vmatprep.subr.mxu0 0.0
        %846 = vmatpush1.msra.mxu0 0.0
        %847 = vmatprep.subr.mxu0 0.0
        %848 = vmatpush1.msra.mxu0 0.0
        %849 = vmatprep.subr.mxu0 0.0
        %850 = vmatpush1.msra.mxu0 0.0
        %851 = vmatprep.mubr.f32.mxu0 0.0
        %852 = vmatmul.mubr.f32.gmra.mrb[0].mxu0 %v776
        %v853 = vpop.f32.mrb[0].mxu0
        %v854 = vadd.f32 %v757, %v853
        %v855 = vpop.f32.mrb[0].mxu0
        %v856 = vadd.f32 %v757, %v855
        %857 = vmatprep.mubr.f32.mxu0 0.0
        %858 = vmatmul.mubr.f32.gmra.mrb[0].mxu0 %v779
        %v859 = vpop.f32.mrb[0].mxu0
        %v860 = vadd.f32 %v762, %v859
        %v861 = vpop.f32.mrb[0].mxu0
        %v862 = vadd.f32 %v762, %v861
        %863 = vmatprep.mubr.f32.mxu0 0.0
        %864 = vmatmul.mubr.f32.gmra.mrb[0].mxu0 %v782
        %v865 = vpop.f32.mrb[0].mxu0
        %v866 = vadd.f32 %v767, %v865
        %v867 = vpop.f32.mrb[0].mxu0
        %v868 = vadd.f32 %v767, %v867
        %869 = vmatprep.mubr.f32.mxu0 0.0
        %870 = vmatmul.mubr.f32.gmra.mrb[0].mxu0 %v785
        %v871 = vpop.f32.mrb[0].mxu0
        %v872 = vadd.f32 %v772, %v871
        %v873 = vpop.f32.mrb[0].mxu0
        %v874 = vadd.f32 %v772, %v873
        %875 = vdwg.mxu0
        %v876 = vadd.f32 %v854, %v434
        %v877 = vadd.f32 %v856, %v435
        %v878 = vadd.f32 %v860, %v436
        %v879 = vadd.f32 %v862, %v437
        %v880 = vadd.f32 %v866, %v438
        %v881 = vadd.f32 %v868, %v439
        %v882 = vadd.f32 %v872, %v440
        %v883 = vadd.f32 %v874, %v441
        %v884 = vmax.f32 %v876, 0.0
        %v885 = vmax.f32 %v877, 0.0
        %v886 = vmax.f32 %v878, 0.0
        %v887 = vmax.f32 %v879, 0.0
        %v888 = vmax.f32 %v880, 0.0
        %v889 = vmax.f32 %v881, 0.0
        %v890 = vmax.f32 %v882, 0.0
        %v891 = vmax.f32 %v883, 0.0
        %892 = vst [vmem:[%s417] sm:$0xff] %v884
        %893 = vst [vmem:[%s417 + $0x8] sm:$0xff] %v885
        %894 = vst [vmem:[%s417 + $0x10] sm:$0xff] %v886
        %895 = vst [vmem:[%s417 + $0x18] sm:$0xff] %v887
        %896 = vst [vmem:[%s417 + $0x20] sm:$0xff] %v888
        %897 = vst [vmem:[%s417 + $0x28] sm:$0xff] %v889
        %898 = vst [vmem:[%s417 + $0x30] sm:$0xff] %v890
        %899 = vst [vmem:[%s417 + $0x38] sm:$0xff] %v891
        %s900 = sand.u32 %s210, 1
        %s901 = scalar_lea.sflag [#allocation4], %s900
        %s902 = sand.u32 %s210, 1
        %s903 = smul.addr %s902, 64
        %s904 = scalar_lea.vmem [#allocation16], %s903
        // Predicated region
        $region85: #{tpu_custom_call.1} parent=51 // pred_check
          %p905 = pneg %p220
        $region86: #{tpu_custom_call.1} parent=51 // pred_check_branch
          %907 = sbr.rel (%p905) target = $region88
        $region87: #{tpu_custom_call.1} parent=51 // pred_region
          %s909 = ssub.s32 1024, 1024
          %910 = vsyncadd %s901, %s909
          %s911 = smul.addr %s29, 8
          %s912 = smul.addr %s911, 128
          %s913 = scalar_lea.hbm %s8, %s912
          %s914 = sshll.u32 %s904, 4
          %s915 = int_to_ptr.vmem [resolvable:$true] %s914
          %920 = dma.vmem_to_hbm [thread:$0]  %s915, 1024, %s913, %s901, 256, 256, 16
        $region88: #{tpu_custom_call.1} parent=51 // pred_fallthru
          _
      $region52: #{tpu_custom_call.1} parent=5 // pred_fallthru
        _
      %p921 = scmp.le.s32.totalorder 2, %s24
      // Predicated region
      $region89: #{tpu_custom_call.1} parent=5 // pred_check
        %p922 = pneg %p921
      $region90: #{tpu_custom_call.1} parent=5 // pred_check_branch
        %924 = sbr.rel (%p922) target = $region92
      $region91: #{tpu_custom_call.1} parent=5 // pred_region
        %s925 = ssub.s32 %s24, 2
        // Predicated region
        $region93: #{tpu_custom_call.1} parent=91 // pred_check
          %p926 = pneg %p226
        $region94: #{tpu_custom_call.1} parent=91 // pred_check_branch
          %928 = sbr.rel (%p926) target = $region96
        $region95: #{tpu_custom_call.1} parent=91 // pred_region
          %s929 = sand.u32 %s211, 1
          %s930 = scalar_lea.sflag [#allocation4], %s929
          %s931 = sand.u32 %s211, 1
          %s932 = smul.addr %s931, 64
          %s933 = scalar_lea.vmem [#allocation16], %s932
          %934 = dma.done %s930, 1024
        $region96: #{tpu_custom_call.1} parent=91 // pred_fallthru
          _
      $region92: #{tpu_custom_call.1} parent=5 // pred_fallthru
        _
    $region6: #{tpu_custom_call.1} parent=1 // loop_footer
      %s28 = sadd.s32 1, %s24
    $region7: #{tpu_custom_call.1} parent=1 // loop_footer_branch
      %23 = sbr.rel target = $region3
    $region8: #{tpu_custom_call.1} parent=1 // loop_exit
      _
    %935 = vsyncpa [#allocation3], 1
    %s936 = scalar_lea.sflag [#allocation3], 1
    %937 = vsyncpa %s936, 1
    %938 = vsyncpa [#allocation6], 1
    %939 = vsyncpa [#allocation9], 1
    %940 = vsyncpa [#allocation12], 1
    %941 = vsyncpa [#allocation15], 1
    %942 = vsyncpa [#allocation4], 1
    %s943 = scalar_lea.sflag [#allocation4], 1
    %944 = vsyncpa %s943, 1

</llo_original>
